<compile_context>
chip_gen: v7x
topology: tpu7x:2x2x1
jax: 0.10.0
libtpu: 0.0.40
codegen_flags: <defaults>
</compile_context>

<pallas_src>
import jax
import jax.numpy as jnp
from jax.experimental import pallas as pl
from jax.experimental.pallas import tpu as pltpu

LANE = 128  # TPU vreg lane width


def _round_up(n, m):
    return ((n + m - 1) // m) * m


def _leaky_relu(v, negative_slope=0.01):
    # PyTorch nn.LeakyReLU() default negative_slope = 0.01.
    # max(v, a*v) == leaky_relu(v) for 0 <= a <= 1; one VPU op cheaper than
    # compare+select (matters on v5e's f32 epilogue, free elsewhere).
    return jnp.maximum(v, negative_slope * v)


def _pad2d(a, rows, cols):
    return jnp.pad(a, ((0, rows - a.shape[0]), (0, cols - a.shape[1])))


# ---------------------------------------------------------------------------
# Kernel: one batch tile, all 4 layers fused.
# bf16 MXU operands, f32 accumulation + epilogue (bias add, LeakyReLU).
# ---------------------------------------------------------------------------
def expnet_kernel(x_ref,
                  w1_ref, b1_ref,
                  w2_ref, b2_ref,
                  w3_ref, b3_ref,
                  w4_ref, b4_ref,
                  o_ref):
    # f32 -> bf16 cast happens here (no separate padded-bf16 copy of x in HBM)
    h = x_ref[...].astype(jnp.bfloat16)  # (TB, Din)

    # hidden_one + LeakyReLU   (dropout1 == identity at eval)
    h = jnp.dot(h, w1_ref[...], preferred_element_type=jnp.float32) + b1_ref[...]
    h = _leaky_relu(h).astype(jnp.bfloat16)

    # pathway_layer + LeakyReLU (dropout2 == identity at eval)
    h = jnp.dot(h, w2_ref[...], preferred_element_type=jnp.float32) + b2_ref[...]
    h = _leaky_relu(h).astype(jnp.bfloat16)

    # hidden_two + LeakyReLU
    h = jnp.dot(h, w3_ref[...], preferred_element_type=jnp.float32) + b3_ref[...]
    h = _leaky_relu(h).astype(jnp.bfloat16)

    # output_layer (no activation)
    out = jnp.dot(h, w4_ref[...], preferred_element_type=jnp.float32) + b4_ref[...]
    o_ref[...] = out.astype(o_ref.dtype)


# ---------------------------------------------------------------------------
# One-time parameter prep: pad output feature dims to 128 lanes, cast weights
# to bf16. Call ONCE and reuse across forwards (perf review item #1).
# ---------------------------------------------------------------------------
def prepare_params(params):
    w1, b1, w2, b2, w3, b3, w4, b4 = params
    Din, H1 = w1.shape
    PW, H2, DO = w2.shape[1], w3.shape[1], w4.shape[1]

    H1_p, PW_p, H2_p, DO_p = (_round_up(d, LANE) for d in (H1, PW, H2, DO))

    # w1's K dim stays at Din (x is fed unpadded; K < 128 is fine on the MXU).
    w1_p = _pad2d(w1, Din, H1_p).astype(jnp.bfloat16)
    w2_p = _pad2d(w2, H1_p, PW_p).astype(jnp.bfloat16)
    w3_p = _pad2d(w3, PW_p, H2_p).astype(jnp.bfloat16)
    w4_p = _pad2d(w4, H2_p, DO_p).astype(jnp.bfloat16)
    # biases stay f32 (f32 epilogue); padded entries are exactly zero.
    b1_p = _pad2d(b1, 1, H1_p)
    b2_p = _pad2d(b2, 1, PW_p)
    b3_p = _pad2d(b3, 1, H2_p)
    b4_p = _pad2d(b4, 1, DO_p)

    return {
        "weights": (w1_p, b1_p, w2_p, b2_p, w3_p, b3_p, w4_p, b4_p),
        "in_dim": Din,
        "out_dim": DO,
        "out_dim_p": DO_p,
    }


# ---------------------------------------------------------------------------
# Forward: tile the batch, keep (pre-padded) weights VMEM-resident.
# ---------------------------------------------------------------------------
def expnet_forward(x, prepared, *, batch_tile=512, out_dtype=jnp.bfloat16):
    w1_p, b1_p, w2_p, b2_p, w3_p, b3_p, w4_p, b4_p = prepared["weights"]
    Din = prepared["in_dim"]
    DO = prepared["out_dim"]
    DO_p = prepared["out_dim_p"]

    B = x.shape[0]
    assert x.shape[1] == Din

    # Batch tile: multiple of 16 sublanes (bf16 packing); collapse to a single
    # grid step for small B, otherwise large tiles to amortize per-step cost.
    tb = _round_up(min(batch_tile, _round_up(B, 16)), 16)
    Bp = _round_up(B, tb)
    if Bp != B:
        x = jnp.pad(x, ((0, Bp - B), (0, 0)))
    grid_steps = Bp // tb

    def resident(a):
        # constant block index -> DMA'd once, stays resident in VMEM across steps
        return pl.BlockSpec(a.shape, lambda i: (0, 0))

    H1_p, PW_p, H2_p = w1_p.shape[1], w2_p.shape[1], w3_p.shape[1]
    flops = 2 * Bp * (Din * H1_p + H1_p * PW_p + PW_p * H2_p + H2_p * DO_p)
    bytes_accessed = (
        x.size * x.dtype.itemsize
        + Bp * DO_p * jnp.dtype(out_dtype).itemsize
        + sum(a.size * a.dtype.itemsize for a in prepared["weights"]))

    # "parallel" only pays off when each v7x core gets >= 2 pipelined steps.
    semantics = ("parallel",) if grid_steps >= 4 else ("arbitrary",)

    out_p = pl.pallas_call(
        expnet_kernel,
        out_shape=jax.ShapeDtypeStruct((Bp, DO_p), out_dtype),
        grid=(grid_steps,),
        in_specs=[pl.BlockSpec((tb, Din), lambda i: (i, 0)),
                  resident(w1_p), resident(b1_p),
                  resident(w2_p), resident(b2_p),
                  resident(w3_p), resident(b3_p),
                  resident(w4_p), resident(b4_p)],
        out_specs=pl.BlockSpec((tb, DO_p), lambda i: (i, 0)),
        compiler_params=pltpu.CompilerParams(
            dimension_semantics=semantics,
            vmem_limit_bytes=32 * 1024 * 1024),  # actual use < 2 MiB; headroom on v7x
        cost_estimate=pl.CostEstimate(
            flops=flops, transcendentals=0, bytes_accessed=bytes_accessed),
    )(x, w1_p, b1_p, w2_p, b2_p, w3_p, b3_p, w4_p, b4_p)

    # slice away batch padding and the zero-padded output lanes
    return out_p[:B, :DO]


# ---------------------------------------------------------------------------
# Parameter setup (PyTorch-Linear-style init + sparsity masks), references
# ---------------------------------------------------------------------------
def make_params(key, input_dim, h1_dim, pw_dim, h2_dim, out_dim):
    ks = jax.random.split(key, 10)

    def linear(kw, kb, fan_in, fan_out):
        bound = 1.0 / jnp.sqrt(fan_in)
        w = jax.random.uniform(kw, (fan_in, fan_out), jnp.float32, -bound, bound)
        b = jax.random.uniform(kb, (1, fan_out), jnp.float32, -bound, bound)
        return w, b

    w1, b1 = linear(ks[0], ks[1], input_dim, h1_dim)
    w2, b2 = linear(ks[2], ks[3], h1_dim, pw_dim)
    w3, b3 = linear(ks[4], ks[5], pw_dim, h2_dim)
    w4, b4 = linear(ks[6], ks[7], h2_dim, out_dim)

    # masks are (in, out) here, matching our (in, out) weight layout; in the
    # PyTorch module the same masks are transposed to fit (out, in) weights.
    input_to_h1_masking = (jax.random.uniform(ks[8], (input_dim, h1_dim)) > 0.5
                           ).astype(jnp.float32)
    h1_to_pathway_masking = (jax.random.uniform(ks[9], (h1_dim, pw_dim)) > 0.5
                             ).astype(jnp.float32)

    w1 = w1 * input_to_h1_masking
    w2 = w2 * h1_to_pathway_masking
    return (w1, b1, w2, b2, w3, b3, w4, b4)


def reference_forward_f32(x, params):
    """Pure-f32 reference (PyTorch eval-mode semantics)."""
    w1, b1, w2, b2, w3, b3, w4, b4 = params
    h = _leaky_relu(x @ w1 + b1)
    h = _leaky_relu(h @ w2 + b2)
    h = _leaky_relu(h @ w3 + b3)
    return h @ w4 + b4


def reference_forward_bf16(x, params):
    """Reference that mimics the kernel's bf16-operand / f32-accumulate path."""
    w1, b1, w2, b2, w3, b3, w4, b4 = params
    bf = lambda a: a.astype(jnp.bfloat16)
    h = bf(x)
    h = jnp.dot(h, bf(w1), preferred_element_type=jnp.float32) + b1
    h = _leaky_relu(h).astype(jnp.bfloat16)
    h = jnp.dot(h, bf(w2), preferred_element_type=jnp.float32) + b2
    h = _leaky_relu(h).astype(jnp.bfloat16)
    h = jnp.dot(h, bf(w3), preferred_element_type=jnp.float32) + b3
    h = _leaky_relu(h).astype(jnp.bfloat16)
    return jnp.dot(h, bf(w4), preferred_element_type=jnp.float32) + b4


if __name__ == "__main__":
    # small shapes consistent with the module's forward
    batch = 256
    input_dim, h1_dim, pw_dim, h2_dim, out_dim = 32, 64, 32, 32, 4

    key = jax.random.PRNGKey(0)
    k_x, k_p = jax.random.split(key)

    x = jax.random.normal(k_x, (batch, input_dim), dtype=jnp.float32)
    params = make_params(k_p, input_dim, h1_dim, pw_dim, h2_dim, out_dim)

    # one-time padding / bf16 cast of the parameters (hoisted out of forward)
    prepared = prepare_params(params)

    fwd = jax.jit(lambda xx: expnet_forward(xx, prepared))
    out = jax.block_until_ready(fwd(x))
    assert out.shape == (batch, out_dim)
    out_f32 = out.astype(jnp.float32)

    # check vs. a reference that follows the same bf16/f32 mixed path
    # (tolerance accounts for the final bf16 output cast)
    ref_bf16 = reference_forward_bf16(x, params)
    assert jnp.allclose(out_f32, ref_bf16, atol=3e-2, rtol=3e-2)

    # loose check vs. the pure-f32 PyTorch-semantics reference (bf16 operands)
    ref_f32 = reference_forward_f32(x, params)
    assert jnp.allclose(out_f32, ref_f32, atol=1e-1, rtol=1e-1)

    print("KERNEL_OK")
</pallas_src>

<mosaic_0001>
module attributes {stable_mosaic.version = 11 : i64} {
  func.func @expnet_kernel(%arg0: i32, %arg1: memref<256x32xf32, #tpu.memory_space<vmem>>, %arg2: memref<32x128xbf16, #tpu.memory_space<vmem>>, %arg3: memref<1x128xf32, #tpu.memory_space<vmem>>, %arg4: memref<128x128xbf16, #tpu.memory_space<vmem>>, %arg5: memref<1x128xf32, #tpu.memory_space<vmem>>, %arg6: memref<128x128xbf16, #tpu.memory_space<vmem>>, %arg7: memref<1x128xf32, #tpu.memory_space<vmem>>, %arg8: memref<128x128xbf16, #tpu.memory_space<vmem>>, %arg9: memref<1x128xf32, #tpu.memory_space<vmem>>, %arg10: memref<256x128xbf16, #tpu.memory_space<vmem>>) attributes {dimension_semantics = [#tpu.dimension_semantics<arbitrary>], iteration_bounds = array<i64: 1>, scalar_prefetch = 0 : i64, scratch_operands = 0 : i64, tpu.core_type = #tpu.core_type<tc>, window_params = [{transform_indices = @transform_0, window_bounds = array<i64: 256, 32>}, {pipeline_mode = #tpu.pipeline_mode<synchronous>, transform_indices = @transform_1, window_bounds = array<i64: 32, 128>}, {pipeline_mode = #tpu.pipeline_mode<synchronous>, transform_indices = @transform_2, window_bounds = array<i64: 1, 128>}, {pipeline_mode = #tpu.pipeline_mode<synchronous>, transform_indices = @transform_3, window_bounds = array<i64: 128, 128>}, {pipeline_mode = #tpu.pipeline_mode<synchronous>, transform_indices = @transform_4, window_bounds = array<i64: 1, 128>}, {pipeline_mode = #tpu.pipeline_mode<synchronous>, transform_indices = @transform_5, window_bounds = array<i64: 128, 128>}, {pipeline_mode = #tpu.pipeline_mode<synchronous>, transform_indices = @transform_6, window_bounds = array<i64: 1, 128>}, {pipeline_mode = #tpu.pipeline_mode<synchronous>, transform_indices = @transform_7, window_bounds = array<i64: 128, 128>}, {pipeline_mode = #tpu.pipeline_mode<synchronous>, transform_indices = @transform_8, window_bounds = array<i64: 1, 128>}, {transform_indices = @transform_9, window_bounds = array<i64: 256, 128>}]} {
    %c0 = arith.constant 0 : index
    %c0_0 = arith.constant 0 : index
    %0 = vector.load %arg1[%c0, %c0_0] : memref<256x32xf32, #tpu.memory_space<vmem>>, vector<256x32xf32>
    %1 = arith.truncf %0 : vector<256x32xf32> to vector<256x32xbf16>
    %c0_1 = arith.constant 0 : index
    %c0_2 = arith.constant 0 : index
    %2 = vector.load %arg2[%c0_1, %c0_2] : memref<32x128xbf16, #tpu.memory_space<vmem>>, vector<32x128xbf16>
    %cst = arith.constant dense<0.000000e+00> : vector<256x128xf32>
    %3 = tpu.matmul %1, %2, %cst {dimension_numbers = #tpu.dot_dimension_numbers<[1], [0], [0], [1], [0, 0, 1, 1], [], []>} : vector<256x32xbf16>, vector<32x128xbf16>, vector<256x128xf32> -> vector<256x128xf32>
    %c0_3 = arith.constant 0 : index
    %c0_4 = arith.constant 0 : index
    %4 = vector.load %arg3[%c0_3, %c0_4] : memref<1x128xf32, #tpu.memory_space<vmem>>, vector<1x128xf32>
    %5 = vector.broadcast %4 : vector<1x128xf32> to vector<256x128xf32>
    %6 = arith.addf %3, %5 : vector<256x128xf32>
    %cst_5 = arith.constant 0.00999999977 : f32
    %7 = vector.broadcast %cst_5 : f32 to vector<256x128xf32>
    %8 = arith.mulf %7, %6 : vector<256x128xf32>
    %9 = arith.maximumf %6, %8 : vector<256x128xf32>
    %10 = arith.truncf %9 : vector<256x128xf32> to vector<256x128xbf16>
    %c0_6 = arith.constant 0 : index
    %c0_7 = arith.constant 0 : index
    %11 = vector.load %arg4[%c0_6, %c0_7] : memref<128x128xbf16, #tpu.memory_space<vmem>>, vector<128x128xbf16>
    %cst_8 = arith.constant dense<0.000000e+00> : vector<256x128xf32>
    %12 = tpu.matmul %10, %11, %cst_8 {dimension_numbers = #tpu.dot_dimension_numbers<[1], [0], [0], [1], [0, 0, 1, 1], [], []>} : vector<256x128xbf16>, vector<128x128xbf16>, vector<256x128xf32> -> vector<256x128xf32>
    %c0_9 = arith.constant 0 : index
    %c0_10 = arith.constant 0 : index
    %13 = vector.load %arg5[%c0_9, %c0_10] : memref<1x128xf32, #tpu.memory_space<vmem>>, vector<1x128xf32>
    %14 = vector.broadcast %13 : vector<1x128xf32> to vector<256x128xf32>
    %15 = arith.addf %12, %14 : vector<256x128xf32>
    %cst_11 = arith.constant 0.00999999977 : f32
    %16 = vector.broadcast %cst_11 : f32 to vector<256x128xf32>
    %17 = arith.mulf %16, %15 : vector<256x128xf32>
    %18 = arith.maximumf %15, %17 : vector<256x128xf32>
    %19 = arith.truncf %18 : vector<256x128xf32> to vector<256x128xbf16>
    %c0_12 = arith.constant 0 : index
    %c0_13 = arith.constant 0 : index
    %20 = vector.load %arg6[%c0_12, %c0_13] : memref<128x128xbf16, #tpu.memory_space<vmem>>, vector<128x128xbf16>
    %cst_14 = arith.constant dense<0.000000e+00> : vector<256x128xf32>
    %21 = tpu.matmul %19, %20, %cst_14 {dimension_numbers = #tpu.dot_dimension_numbers<[1], [0], [0], [1], [0, 0, 1, 1], [], []>} : vector<256x128xbf16>, vector<128x128xbf16>, vector<256x128xf32> -> vector<256x128xf32>
    %c0_15 = arith.constant 0 : index
    %c0_16 = arith.constant 0 : index
    %22 = vector.load %arg7[%c0_15, %c0_16] : memref<1x128xf32, #tpu.memory_space<vmem>>, vector<1x128xf32>
    %23 = vector.broadcast %22 : vector<1x128xf32> to vector<256x128xf32>
    %24 = arith.addf %21, %23 : vector<256x128xf32>
    %cst_17 = arith.constant 0.00999999977 : f32
    %25 = vector.broadcast %cst_17 : f32 to vector<256x128xf32>
    %26 = arith.mulf %25, %24 : vector<256x128xf32>
    %27 = arith.maximumf %24, %26 : vector<256x128xf32>
    %28 = arith.truncf %27 : vector<256x128xf32> to vector<256x128xbf16>
    %c0_18 = arith.constant 0 : index
    %c0_19 = arith.constant 0 : index
    %29 = vector.load %arg8[%c0_18, %c0_19] : memref<128x128xbf16, #tpu.memory_space<vmem>>, vector<128x128xbf16>
    %cst_20 = arith.constant dense<0.000000e+00> : vector<256x128xf32>
    %30 = tpu.matmul %28, %29, %cst_20 {dimension_numbers = #tpu.dot_dimension_numbers<[1], [0], [0], [1], [0, 0, 1, 1], [], []>} : vector<256x128xbf16>, vector<128x128xbf16>, vector<256x128xf32> -> vector<256x128xf32>
    %c0_21 = arith.constant 0 : index
    %c0_22 = arith.constant 0 : index
    %31 = vector.load %arg9[%c0_21, %c0_22] : memref<1x128xf32, #tpu.memory_space<vmem>>, vector<1x128xf32>
    %32 = vector.broadcast %31 : vector<1x128xf32> to vector<256x128xf32>
    %33 = arith.addf %30, %32 : vector<256x128xf32>
    %34 = arith.truncf %33 : vector<256x128xf32> to vector<256x128xbf16>
    %c0_23 = arith.constant 0 : index
    %c0_24 = arith.constant 0 : index
    %35 = vector.load %arg10[%c0_23, %c0_24] : memref<256x128xbf16, #tpu.memory_space<vmem>>, vector<256x128xbf16>
    tpu.vector_store %arg10[%c0_23, %c0_24], %34 {strides = array<i32>} : memref<256x128xbf16, #tpu.memory_space<vmem>>, vector<256x128xbf16>,
    return
  }
  func.func @transform_0(%arg0: i32) -> (i32, i32) {
    %c0_i32 = arith.constant 0 : i32
    %c0_i32_0 = arith.constant 0 : i32
    return %arg0, %c0_i32 : i32, i32
  }
  func.func @transform_1(%arg0: i32) -> (i32, i32) {
    %c0_i32 = arith.constant 0 : i32
    %c0_i32_0 = arith.constant 0 : i32
    %c0_i32_1 = arith.constant 0 : i32
    return %c0_i32, %c0_i32_0 : i32, i32
  }
  func.func @transform_2(%arg0: i32) -> (i32, i32) {
    %c0_i32 = arith.constant 0 : i32
    %c0_i32_0 = arith.constant 0 : i32
    %c0_i32_1 = arith.constant 0 : i32
    return %c0_i32, %c0_i32_0 : i32, i32
  }
  func.func @transform_3(%arg0: i32) -> (i32, i32) {
    %c0_i32 = arith.constant 0 : i32
    %c0_i32_0 = arith.constant 0 : i32
    %c0_i32_1 = arith.constant 0 : i32
    return %c0_i32, %c0_i32_0 : i32, i32
  }
  func.func @transform_4(%arg0: i32) -> (i32, i32) {
    %c0_i32 = arith.constant 0 : i32
    %c0_i32_0 = arith.constant 0 : i32
    %c0_i32_1 = arith.constant 0 : i32
    return %c0_i32, %c0_i32_0 : i32, i32
  }
  func.func @transform_5(%arg0: i32) -> (i32, i32) {
    %c0_i32 = arith.constant 0 : i32
    %c0_i32_0 = arith.constant 0 : i32
    %c0_i32_1 = arith.constant 0 : i32
    return %c0_i32, %c0_i32_0 : i32, i32
  }
  func.func @transform_6(%arg0: i32) -> (i32, i32) {
    %c0_i32 = arith.constant 0 : i32
    %c0_i32_0 = arith.constant 0 : i32
    %c0_i32_1 = arith.constant 0 : i32
    return %c0_i32, %c0_i32_0 : i32, i32
  }
  func.func @transform_7(%arg0: i32) -> (i32, i32) {
    %c0_i32 = arith.constant 0 : i32
    %c0_i32_0 = arith.constant 0 : i32
    %c0_i32_1 = arith.constant 0 : i32
    return %c0_i32, %c0_i32_0 : i32, i32
  }
  func.func @transform_8(%arg0: i32) -> (i32, i32) {
    %c0_i32 = arith.constant 0 : i32
    %c0_i32_0 = arith.constant 0 : i32
    %c0_i32_1 = arith.constant 0 : i32
    return %c0_i32, %c0_i32_0 : i32, i32
  }
  func.func @transform_9(%arg0: i32) -> (i32, i32) {
    %c0_i32 = arith.constant 0 : i32
    %c0_i32_0 = arith.constant 0 : i32
    return %arg0, %c0_i32 : i32, i32
  }
}

</mosaic_0001>

<llo_original>
// kernel: _lambda_.1
$region0: #{_lambda_.1}
  #allocation0 [shape = 'u32[]', space=smem, size = 0x4, offset = 0x4, fixed_abs, tag = 'smem constant byte address 0x4 - core index']
  #allocation1 [shape = 'u32[144,128]{1,0:T(1,128)}', space=vmem, size = 0x12000, scoped, tag = 'internal scratch']
  %s0 = inlined_call_operand.vmem [shape: f32[256,32], index: 0, kind: input, shape index: {}]
  %s1 = inlined_call_operand.vmem [shape: bf16[32,128], index: 1, kind: input, shape index: {}]
  %s2 = inlined_call_operand.vmem [shape: f32[1,128], index: 2, kind: input, shape index: {}]
  %s3 = inlined_call_operand.vmem [shape: bf16[128,128], index: 3, kind: input, shape index: {}]
  %s4 = inlined_call_operand.vmem [shape: f32[1,128], index: 4, kind: input, shape index: {}]
  %s5 = inlined_call_operand.vmem [shape: bf16[128,128], index: 5, kind: input, shape index: {}]
  %s6 = inlined_call_operand.vmem [shape: f32[1,128], index: 6, kind: input, shape index: {}]
  %s7 = inlined_call_operand.vmem [shape: bf16[128,128], index: 7, kind: input, shape index: {}]
  %s8 = inlined_call_operand.vmem [shape: f32[1,128], index: 8, kind: input, shape index: {}]
  %s9 = inlined_call_operand.vmem [shape: bf16[256,128], index: 9, kind: output, shape index: {}]
  %s10 = sld [smem:[#allocation0]]
  $region46: #{_lambda_.1} parent=0
    _
  %s12 = ssub.s32 1, %s10
  %s13 = scalar_select 0, %s12, %s10
  // Predicated region
  $region2: #{_lambda_.1} parent=0 // pred_check
    _
  $region3: #{_lambda_.1} parent=0 // pred_check_branch
    %15 = sbr.rel (0) target = $region5
  $region4: #{_lambda_.1} parent=0 // pred_region
    _
  $region5: #{_lambda_.1} parent=0 // pred_fallthru
    _
  // Predicated region
  $region6: #{_lambda_.1} parent=0 // pred_check
    _
  $region7: #{_lambda_.1} parent=0 // pred_check_branch
    %17 = sbr.rel (0) target = $region9
  $region8: #{_lambda_.1} parent=0 // pred_region
    _
  $region9: #{_lambda_.1} parent=0 // pred_fallthru
    _
  // Predicated region
  $region10: #{_lambda_.1} parent=0 // pred_check
    _
  $region11: #{_lambda_.1} parent=0 // pred_check_branch
    %19 = sbr.rel (0) target = $region13
  $region12: #{_lambda_.1} parent=0 // pred_region
    _
  $region13: #{_lambda_.1} parent=0 // pred_fallthru
    _
  // Predicated region
  $region14: #{_lambda_.1} parent=0 // pred_check
    _
  $region15: #{_lambda_.1} parent=0 // pred_check_branch
    %21 = sbr.rel (0) target = $region17
  $region16: #{_lambda_.1} parent=0 // pred_region
    _
  $region17: #{_lambda_.1} parent=0 // pred_fallthru
    _
  // Predicated region
  $region18: #{_lambda_.1} parent=0 // pred_check
    _
  $region19: #{_lambda_.1} parent=0 // pred_check_branch
    %23 = sbr.rel (0) target = $region21
  $region20: #{_lambda_.1} parent=0 // pred_region
    _
  $region21: #{_lambda_.1} parent=0 // pred_fallthru
    _
  // Predicated region
  $region22: #{_lambda_.1} parent=0 // pred_check
    _
  $region23: #{_lambda_.1} parent=0 // pred_check_branch
    %25 = sbr.rel (0) target = $region25
  $region24: #{_lambda_.1} parent=0 // pred_region
    _
  $region25: #{_lambda_.1} parent=0 // pred_fallthru
    _
  // Predicated region
  $region26: #{_lambda_.1} parent=0 // pred_check
    _
  $region27: #{_lambda_.1} parent=0 // pred_check_branch
    %27 = sbr.rel (0) target = $region29
  $region28: #{_lambda_.1} parent=0 // pred_region
    _
  $region29: #{_lambda_.1} parent=0 // pred_fallthru
    _
  // Predicated region
  $region30: #{_lambda_.1} parent=0 // pred_check
    _
  $region31: #{_lambda_.1} parent=0 // pred_check_branch
    %29 = sbr.rel (0) target = $region33
  $region32: #{_lambda_.1} parent=0 // pred_region
    _
  $region33: #{_lambda_.1} parent=0 // pred_fallthru
    _
  // Predicated region
  $region34: #{_lambda_.1} parent=0 // pred_check
    _
  $region35: #{_lambda_.1} parent=0 // pred_check_branch
    %31 = sbr.rel (0) target = $region37
  $region36: #{_lambda_.1} parent=0 // pred_region
    _
  $region37: #{_lambda_.1} parent=0 // pred_fallthru
    _
  %v33 = vld [vmem:[%s0] sm:$0xff]
  %v34 = vld [vmem:[%s0 + $0x8] sm:$0xff]
  %v35 = vld [vmem:[%s0 + $0x10] sm:$0xff]
  %v36 = vld [vmem:[%s0 + $0x18] sm:$0xff]
  %v37 = vld [vmem:[%s0 + $0x20] sm:$0xff]
  %v38 = vld [vmem:[%s0 + $0x28] sm:$0xff]
  %v39 = vld [vmem:[%s0 + $0x30] sm:$0xff]
  %v40 = vld [vmem:[%s0 + $0x38] sm:$0xff]
  %v41 = vld [vmem:[%s0 + $0x40] sm:$0xff]
  %v42 = vld [vmem:[%s0 + $0x48] sm:$0xff]
  %v43 = vld [vmem:[%s0 + $0x50] sm:$0xff]
  %v44 = vld [vmem:[%s0 + $0x58] sm:$0xff]
  %v45 = vld [vmem:[%s0 + $0x60] sm:$0xff]
  %v46 = vld [vmem:[%s0 + $0x68] sm:$0xff]
  %v47 = vld [vmem:[%s0 + $0x70] sm:$0xff]
  %v48 = vld [vmem:[%s0 + $0x78] sm:$0xff]
  %v49 = vld [vmem:[%s0 + $0x80] sm:$0xff]
  %v50 = vld [vmem:[%s0 + $0x88] sm:$0xff]
  %v51 = vld [vmem:[%s0 + $0x90] sm:$0xff]
  %v52 = vld [vmem:[%s0 + $0x98] sm:$0xff]
  %v53 = vld [vmem:[%s0 + $0xa0] sm:$0xff]
  %v54 = vld [vmem:[%s0 + $0xa8] sm:$0xff]
  %v55 = vld [vmem:[%s0 + $0xb0] sm:$0xff]
  %v56 = vld [vmem:[%s0 + $0xb8] sm:$0xff]
  %v57 = vld [vmem:[%s0 + $0xc0] sm:$0xff]
  %v58 = vld [vmem:[%s0 + $0xc8] sm:$0xff]
  %v59 = vld [vmem:[%s0 + $0xd0] sm:$0xff]
  %v60 = vld [vmem:[%s0 + $0xd8] sm:$0xff]
  %v61 = vld [vmem:[%s0 + $0xe0] sm:$0xff]
  %v62 = vld [vmem:[%s0 + $0xe8] sm:$0xff]
  %v63 = vld [vmem:[%s0 + $0xf0] sm:$0xff]
  %v64 = vld [vmem:[%s0 + $0xf8] sm:$0xff]
  %v65 = vpack.c.bf16 %v34, %v33
  %v66 = vpack.c.bf16 %v36, %v35
  %v67 = vpack.c.bf16 %v38, %v37
  %v68 = vpack.c.bf16 %v40, %v39
  %v69 = vpack.c.bf16 %v42, %v41
  %v70 = vpack.c.bf16 %v44, %v43
  %v71 = vpack.c.bf16 %v46, %v45
  %v72 = vpack.c.bf16 %v48, %v47
  %v73 = vpack.c.bf16 %v50, %v49
  %v74 = vpack.c.bf16 %v52, %v51
  %v75 = vpack.c.bf16 %v54, %v53
  %v76 = vpack.c.bf16 %v56, %v55
  %v77 = vpack.c.bf16 %v58, %v57
  %v78 = vpack.c.bf16 %v60, %v59
  %v79 = vpack.c.bf16 %v62, %v61
  %v80 = vpack.c.bf16 %v64, %v63
  %v81 = vld [vmem:[%s1] sm:$0xf]
  %v82 = vld [vmem:[%s1 + $0x4] sm:$0xf]
  %v83 = vld [vmem:[%s1 + $0x8] sm:$0xf]
  %v84 = vld [vmem:[%s1 + $0xc] sm:$0xf]
  %v85 = vld [vmem:[%s2] sm:$0x1]
  %v87 = vlaneseq
  %v88 = vshrl.u32 %v87, 7
  %v89 = vsub.s32 0, %v88
  %v90 = vrot.slane %v85, %v89
  %v96 = vunpack.c.l.b16 %v81
  %v97 = vunpack.c.l.b16 %v82
  %v98 = vunpack.c.l.b16 %v83
  %v99 = vunpack.c.l.b16 %v84
  %v100 = vpack.c.b16 %v97, %v96
  %v101 = vpack.c.b16 %v99, %v98
  %vm104 = vcmask 261120
  %v106 = vsel %vm104, %v65, 0
  %v109 = vsel %vm104, %v66, 0
  %v112 = vsel %vm104, %v67, 0
  %v115 = vsel %vm104, %v68, 0
  %v118 = vsel %vm104, %v69, 0
  %v121 = vsel %vm104, %v70, 0
  %v124 = vsel %vm104, %v71, 0
  %v127 = vsel %vm104, %v72, 0
  %v130 = vsel %vm104, %v73, 0
  %v133 = vsel %vm104, %v74, 0
  %v136 = vsel %vm104, %v75, 0
  %v139 = vsel %vm104, %v76, 0
  %v142 = vsel %vm104, %v77, 0
  %v145 = vsel %vm104, %v78, 0
  %v148 = vsel %vm104, %v79, 0
  %v151 = vsel %vm104, %v80, 0
  %153 = vmatprep.subr.bf16.mxu0 0
  %154 = vmatpush1.bf16.msra.mxu0 %v100
  %155 = vmatprep.subr.bf16.mxu0 0
  %156 = vmatpush1.bf16.msra.mxu0 %v101
  %157 = vmatprep.subr.bf16.mxu0 0
  %158 = vmatpush1.bf16.msra.mxu0 0
  %159 = vmatprep.subr.bf16.mxu0 0
  %160 = vmatpush1.bf16.msra.mxu0 0
  %161 = vmatprep.subr.bf16.mxu0 0
  %162 = vmatpush1.bf16.msra.mxu0 0
  %163 = vmatprep.subr.bf16.mxu0 0
  %164 = vmatpush1.bf16.msra.mxu0 0
  %165 = vmatprep.subr.bf16.mxu0 0
  %166 = vmatpush1.bf16.msra.mxu0 0
  %167 = vmatprep.subr.bf16.mxu0 0
  %168 = vmatpush1.bf16.msra.mxu0 0
  %169 = vmatprep.subr.bf16.mxu0 0
  %170 = vmatpush1.bf16.msra.mxu0 0
  %171 = vmatprep.subr.bf16.mxu0 0
  %172 = vmatpush1.bf16.msra.mxu0 0
  %173 = vmatprep.subr.bf16.mxu0 0
  %174 = vmatpush1.bf16.msra.mxu0 0
  %175 = vmatprep.subr.bf16.mxu0 0
  %176 = vmatpush1.bf16.msra.mxu0 0
  %177 = vmatprep.subr.bf16.mxu0 0
  %178 = vmatpush1.bf16.msra.mxu0 0
  %179 = vmatprep.subr.bf16.mxu0 0
  %180 = vmatpush1.bf16.msra.mxu0 0
  %181 = vmatprep.subr.bf16.mxu0 0
  %182 = vmatpush1.bf16.msra.mxu0 0
  %183 = vmatprep.subr.bf16.mxu0 0
  %184 = vmatpush1.bf16.msra.mxu0 0
  %185 = vmatprep.mubr.bf16.mxu0 0
  %186 = vmatmul.mubr.bf16.gmra.mrb[0].mxu0 %v106
  %v187 = vpop.f32.mrb[0].mxu0
  %v188 = vadd.f32 %v90, %v187
  %v189 = vpop.f32.mrb[0].mxu0
  %v190 = vpop.f32.mrb[0].mxu0
  %v191 = vadd.f32 %v90, %v190
  %v192 = vpop.f32.mrb[0].mxu0
  %193 = vmatprep.mubr.bf16.mxu0 0
  %194 = vmatmul.mubr.bf16.gmra.mrb[0].mxu0 %v109
  %v195 = vpop.f32.mrb[0].mxu0
  %v196 = vadd.f32 %v90, %v195
  %v197 = vpop.f32.mrb[0].mxu0
  %v198 = vpop.f32.mrb[0].mxu0
  %v199 = vadd.f32 %v90, %v198
  %v200 = vpop.f32.mrb[0].mxu0
  %201 = vmatprep.mubr.bf16.mxu0 0
  %202 = vmatmul.mubr.bf16.gmra.mrb[0].mxu0 %v112
  %v203 = vpop.f32.mrb[0].mxu0
  %v204 = vadd.f32 %v90, %v203
  %v205 = vpop.f32.mrb[0].mxu0
  %v206 = vpop.f32.mrb[0].mxu0
  %v207 = vadd.f32 %v90, %v206
  %v208 = vpop.f32.mrb[0].mxu0
  %209 = vmatprep.mubr.bf16.mxu0 0
  %210 = vmatmul.mubr.bf16.gmra.mrb[0].mxu0 %v115
  %v211 = vpop.f32.mrb[0].mxu0
  %v212 = vadd.f32 %v90, %v211
  %v213 = vpop.f32.mrb[0].mxu0
  %v214 = vpop.f32.mrb[0].mxu0
  %v215 = vadd.f32 %v90, %v214
  %v216 = vpop.f32.mrb[0].mxu0
  %217 = vmatprep.mubr.bf16.mxu0 0
  %218 = vmatmul.mubr.bf16.gmra.mrb[0].mxu0 %v118
  %v219 = vpop.f32.mrb[0].mxu0
  %v220 = vadd.f32 %v90, %v219
  %v221 = vpop.f32.mrb[0].mxu0
  %v222 = vpop.f32.mrb[0].mxu0
  %v223 = vadd.f32 %v90, %v222
  %v224 = vpop.f32.mrb[0].mxu0
  %225 = vmatprep.mubr.bf16.mxu0 0
  %226 = vmatmul.mubr.bf16.gmra.mrb[0].mxu0 %v121
  %v227 = vpop.f32.mrb[0].mxu0
  %v228 = vadd.f32 %v90, %v227
  %v229 = vpop.f32.mrb[0].mxu0
  %v230 = vpop.f32.mrb[0].mxu0
  %v231 = vadd.f32 %v90, %v230
  %v232 = vpop.f32.mrb[0].mxu0
  %233 = vmatprep.mubr.bf16.mxu0 0
  %234 = vmatmul.mubr.bf16.gmra.mrb[0].mxu0 %v124
  %v235 = vpop.f32.mrb[0].mxu0
  %v236 = vadd.f32 %v90, %v235
  %v237 = vpop.f32.mrb[0].mxu0
  %v238 = vpop.f32.mrb[0].mxu0
  %v239 = vadd.f32 %v90, %v238
  %v240 = vpop.f32.mrb[0].mxu0
  %241 = vmatprep.mubr.bf16.mxu0 0
  %242 = vmatmul.mubr.bf16.gmra.mrb[0].mxu0 %v127
  %v243 = vpop.f32.mrb[0].mxu0
  %v244 = vadd.f32 %v90, %v243
  %v245 = vpop.f32.mrb[0].mxu0
  %v246 = vpop.f32.mrb[0].mxu0
  %v247 = vadd.f32 %v90, %v246
  %v248 = vpop.f32.mrb[0].mxu0
  %249 = vmatprep.mubr.bf16.mxu0 0
  %250 = vmatmul.mubr.bf16.gmra.mrb[0].mxu0 %v130
  %v251 = vpop.f32.mrb[0].mxu0
  %v252 = vadd.f32 %v90, %v251
  %v253 = vpop.f32.mrb[0].mxu0
  %v254 = vpop.f32.mrb[0].mxu0
  %v255 = vadd.f32 %v90, %v254
  %v256 = vpop.f32.mrb[0].mxu0
  %257 = vmatprep.mubr.bf16.mxu0 0
  %258 = vmatmul.mubr.bf16.gmra.mrb[0].mxu0 %v133
  %v259 = vpop.f32.mrb[0].mxu0
  %v260 = vadd.f32 %v90, %v259
  %v261 = vpop.f32.mrb[0].mxu0
  %v262 = vpop.f32.mrb[0].mxu0
  %v263 = vadd.f32 %v90, %v262
  %v264 = vpop.f32.mrb[0].mxu0
  %265 = vmatprep.mubr.bf16.mxu0 0
  %266 = vmatmul.mubr.bf16.gmra.mrb[0].mxu0 %v136
  %v267 = vpop.f32.mrb[0].mxu0
  %v268 = vadd.f32 %v90, %v267
  %v269 = vpop.f32.mrb[0].mxu0
  %v270 = vpop.f32.mrb[0].mxu0
  %v271 = vadd.f32 %v90, %v270
  %v272 = vpop.f32.mrb[0].mxu0
  %273 = vmatprep.mubr.bf16.mxu0 0
  %274 = vmatmul.mubr.bf16.gmra.mrb[0].mxu0 %v139
  %v275 = vpop.f32.mrb[0].mxu0
  %v276 = vadd.f32 %v90, %v275
  %v277 = vpop.f32.mrb[0].mxu0
  %v278 = vpop.f32.mrb[0].mxu0
  %v279 = vadd.f32 %v90, %v278
  %v280 = vpop.f32.mrb[0].mxu0
  %281 = vmatprep.mubr.bf16.mxu0 0
  %282 = vmatmul.mubr.bf16.gmra.mrb[0].mxu0 %v142
  %v283 = vpop.f32.mrb[0].mxu0
  %v284 = vadd.f32 %v90, %v283
  %v285 = vpop.f32.mrb[0].mxu0
  %v286 = vpop.f32.mrb[0].mxu0
  %v287 = vadd.f32 %v90, %v286
  %v288 = vpop.f32.mrb[0].mxu0
  %289 = vmatprep.mubr.bf16.mxu0 0
  %290 = vmatmul.mubr.bf16.gmra.mrb[0].mxu0 %v145
  %v291 = vpop.f32.mrb[0].mxu0
  %v292 = vadd.f32 %v90, %v291
  %v293 = vpop.f32.mrb[0].mxu0
  %v294 = vpop.f32.mrb[0].mxu0
  %v295 = vadd.f32 %v90, %v294
  %v296 = vpop.f32.mrb[0].mxu0
  %297 = vmatprep.mubr.bf16.mxu0 0
  %298 = vmatmul.mubr.bf16.gmra.mrb[0].mxu0 %v148
  %v299 = vpop.f32.mrb[0].mxu0
  %v300 = vadd.f32 %v90, %v299
  %v301 = vpop.f32.mrb[0].mxu0
  %v302 = vpop.f32.mrb[0].mxu0
  %v303 = vadd.f32 %v90, %v302
  %v304 = vpop.f32.mrb[0].mxu0
  %305 = vmatprep.mubr.bf16.mxu0 0
  %306 = vmatmul.mubr.bf16.gmra.mrb[0].mxu0 %v151
  %v307 = vpop.f32.mrb[0].mxu0
  %v308 = vadd.f32 %v90, %v307
  %v309 = vpop.f32.mrb[0].mxu0
  %v310 = vpop.f32.mrb[0].mxu0
  %v311 = vadd.f32 %v90, %v310
  %v312 = vpop.f32.mrb[0].mxu0
  %313 = vdwg.mxu0
  %v314 = vmul.f32 %v188, 0.01
  %v315 = vmul.f32 %v191, 0.01
  %v316 = vmul.f32 %v196, 0.01
  %v317 = vmul.f32 %v199, 0.01
  %v318 = vmul.f32 %v204, 0.01
  %v319 = vmul.f32 %v207, 0.01
  %v320 = vmul.f32 %v212, 0.01
  %v321 = vmul.f32 %v215, 0.01
  %v322 = vmul.f32 %v220, 0.01
  %v323 = vmul.f32 %v223, 0.01
  %v324 = vmul.f32 %v228, 0.01
  %v325 = vmul.f32 %v231, 0.01
  %v326 = vmul.f32 %v236, 0.01
  %v327 = vmul.f32 %v239, 0.01
  %v328 = vmul.f32 %v244, 0.01
  %v329 = vmul.f32 %v247, 0.01
  %v330 = vmul.f32 %v252, 0.01
  %v331 = vmul.f32 %v255, 0.01
  %v332 = vmul.f32 %v260, 0.01
  %v333 = vmul.f32 %v263, 0.01
  %v334 = vmul.f32 %v268, 0.01
  %v335 = vmul.f32 %v271, 0.01
  %v336 = vmul.f32 %v276, 0.01
  %v337 = vmul.f32 %v279, 0.01
  %v338 = vmul.f32 %v284, 0.01
  %v339 = vmul.f32 %v287, 0.01
  %v340 = vmul.f32 %v292, 0.01
  %v341 = vmul.f32 %v295, 0.01
  %v342 = vmul.f32 %v300, 0.01
  %v343 = vmul.f32 %v303, 0.01
  %v344 = vmul.f32 %v308, 0.01
  %v345 = vmul.f32 %v311, 0.01
  %v346 = vmax.f32 %v188, %v314
  %v347 = vmax.f32 %v191, %v315
  %v348 = vmax.f32 %v196, %v316
  %v349 = vmax.f32 %v199, %v317
  %v350 = vmax.f32 %v204, %v318
  %v351 = vmax.f32 %v207, %v319
  %v352 = vmax.f32 %v212, %v320
  %v353 = vmax.f32 %v215, %v321
  %v354 = vmax.f32 %v220, %v322
  %v355 = vmax.f32 %v223, %v323
  %v356 = vmax.f32 %v228, %v324
  %v357 = vmax.f32 %v231, %v325
  %v358 = vmax.f32 %v236, %v326
  %v359 = vmax.f32 %v239, %v327
  %v360 = vmax.f32 %v244, %v328
  %v361 = vmax.f32 %v247, %v329
  %v362 = vmax.f32 %v252, %v330
  %v363 = vmax.f32 %v255, %v331
  %v364 = vmax.f32 %v260, %v332
  %v365 = vmax.f32 %v263, %v333
  %v366 = vmax.f32 %v268, %v334
  %v367 = vmax.f32 %v271, %v335
  %v368 = vmax.f32 %v276, %v336
  %v369 = vmax.f32 %v279, %v337
  %v370 = vmax.f32 %v284, %v338
  %v371 = vmax.f32 %v287, %v339
  %v372 = vmax.f32 %v292, %v340
  %v373 = vmax.f32 %v295, %v341
  %v374 = vmax.f32 %v300, %v342
  %v375 = vmax.f32 %v303, %v343
  %v376 = vmax.f32 %v308, %v344
  %v377 = vmax.f32 %v311, %v345
  %v378 = vpack.c.bf16 %v347, %v346
  %v379 = vpack.c.bf16 %v349, %v348
  %v380 = vpack.c.bf16 %v351, %v350
  %v381 = vpack.c.bf16 %v353, %v352
  %v382 = vpack.c.bf16 %v355, %v354
  %v383 = vpack.c.bf16 %v357, %v356
  %v384 = vpack.c.bf16 %v359, %v358
  %v385 = vpack.c.bf16 %v361, %v360
  %v386 = vpack.c.bf16 %v363, %v362
  %v387 = vpack.c.bf16 %v365, %v364
  %v388 = vpack.c.bf16 %v367, %v366
  %v389 = vpack.c.bf16 %v369, %v368
  %v390 = vpack.c.bf16 %v371, %v370
  %v391 = vpack.c.bf16 %v373, %v372
  %v392 = vpack.c.bf16 %v375, %v374
  %v393 = vpack.c.bf16 %v377, %v376
  %v394 = vld [vmem:[%s3] sm:$0xf]
  %v395 = vld [vmem:[%s3 + $0x4] sm:$0xf]
  %v396 = vld [vmem:[%s3 + $0x8] sm:$0xf]
  %v397 = vld [vmem:[%s3 + $0xc] sm:$0xf]
  %v398 = vld [vmem:[%s3 + $0x10] sm:$0xf]
  %v399 = vld [vmem:[%s3 + $0x14] sm:$0xf]
  %v400 = vld [vmem:[%s3 + $0x18] sm:$0xf]
  %v401 = vld [vmem:[%s3 + $0x1c] sm:$0xf]
  %v402 = vld [vmem:[%s3 + $0x20] sm:$0xf]
  %v403 = vld [vmem:[%s3 + $0x24] sm:$0xf]
  %v404 = vld [vmem:[%s3 + $0x28] sm:$0xf]
  %v405 = vld [vmem:[%s3 + $0x2c] sm:$0xf]
  %v406 = vld [vmem:[%s3 + $0x30] sm:$0xf]
  %v407 = vld [vmem:[%s3 + $0x34] sm:$0xf]
  %v408 = vld [vmem:[%s3 + $0x38] sm:$0xf]
  %v409 = vld [vmem:[%s3 + $0x3c] sm:$0xf]
  %v410 = vld [vmem:[%s4] sm:$0x1]
  %v412 = vlaneseq
  %v413 = vshrl.u32 %v412, 7
  %v414 = vsub.s32 0, %v413
  %v415 = vrot.slane %v410, %v414
  %v433 = vunpack.c.l.b16 %v394
  %v434 = vunpack.c.l.b16 %v395
  %v435 = vunpack.c.l.b16 %v396
  %v436 = vunpack.c.l.b16 %v397
  %v437 = vunpack.c.l.b16 %v398
  %v438 = vunpack.c.l.b16 %v399
  %v439 = vunpack.c.l.b16 %v400
  %v440 = vunpack.c.l.b16 %v401
  %v441 = vunpack.c.l.b16 %v402
  %v442 = vunpack.c.l.b16 %v403
  %v443 = vunpack.c.l.b16 %v404
  %v444 = vunpack.c.l.b16 %v405
  %v445 = vunpack.c.l.b16 %v406
  %v446 = vunpack.c.l.b16 %v407
  %v447 = vunpack.c.l.b16 %v408
  %v448 = vunpack.c.l.b16 %v409
  %v449 = vpack.c.b16 %v434, %v433
  %v450 = vpack.c.b16 %v436, %v435
  %v451 = vpack.c.b16 %v438, %v437
  %v452 = vpack.c.b16 %v440, %v439
  %v453 = vpack.c.b16 %v442, %v441
  %v454 = vpack.c.b16 %v444, %v443
  %v455 = vpack.c.b16 %v446, %v445
  %v456 = vpack.c.b16 %v448, %v447
  %465 = vmatprep.subr.bf16.mxu0 0
  %466 = vmatpush1.bf16.msra.mxu0 %v449
  %467 = vmatprep.subr.bf16.mxu0 0
  %468 = vmatpush1.bf16.msra.mxu0 %v450
  %469 = vmatprep.subr.bf16.mxu0 0
  %470 = vmatpush1.bf16.msra.mxu0 %v451
  %471 = vmatprep.subr.bf16.mxu0 0
  %472 = vmatpush1.bf16.msra.mxu0 %v452
  %473 = vmatprep.subr.bf16.mxu0 0
  %474 = vmatpush1.bf16.msra.mxu0 %v453
  %475 = vmatprep.subr.bf16.mxu0 0
  %476 = vmatpush1.bf16.msra.mxu0 %v454
  %477 = vmatprep.subr.bf16.mxu0 0
  %478 = vmatpush1.bf16.msra.mxu0 %v455
  %479 = vmatprep.subr.bf16.mxu0 0
  %480 = vmatpush1.bf16.msra.mxu0 %v456
  %481 = vmatprep.subr.bf16.mxu0 0
  %482 = vmatpush1.bf16.msra.mxu0 0
  %483 = vmatprep.subr.bf16.mxu0 0
  %484 = vmatpush1.bf16.msra.mxu0 0
  %485 = vmatprep.subr.bf16.mxu0 0
  %486 = vmatpush1.bf16.msra.mxu0 0
  %487 = vmatprep.subr.bf16.mxu0 0
  %488 = vmatpush1.bf16.msra.mxu0 0
  %489 = vmatprep.subr.bf16.mxu0 0
  %490 = vmatpush1.bf16.msra.mxu0 0
  %491 = vmatprep.subr.bf16.mxu0 0
  %492 = vmatpush1.bf16.msra.mxu0 0
  %493 = vmatprep.subr.bf16.mxu0 0
  %494 = vmatpush1.bf16.msra.mxu0 0
  %495 = vmatprep.subr.bf16.mxu0 0
  %496 = vmatpush1.bf16.msra.mxu0 0
  %497 = vmatprep.mubr.bf16.mxu0 0
  %498 = vmatmul.mubr.bf16.gmra.mrb[0].mxu0 %v378
  %v499 = vpop.f32.mrb[0].mxu0
  %v500 = vadd.f32 %v415, %v499
  %v501 = vpop.f32.mrb[0].mxu0
  %v502 = vpop.f32.mrb[0].mxu0
  %v503 = vadd.f32 %v415, %v502
  %v504 = vpop.f32.mrb[0].mxu0
  %505 = vmatprep.mubr.bf16.mxu0 0
  %506 = vmatmul.mubr.bf16.gmra.mrb[0].mxu0 %v379
  %v507 = vpop.f32.mrb[0].mxu0
  %v508 = vadd.f32 %v415, %v507
  %v509 = vpop.f32.mrb[0].mxu0
  %v510 = vpop.f32.mrb[0].mxu0
  %v511 = vadd.f32 %v415, %v510
  %v512 = vpop.f32.mrb[0].mxu0
  %513 = vmatprep.mubr.bf16.mxu0 0
  %514 = vmatmul.mubr.bf16.gmra.mrb[0].mxu0 %v380
  %v515 = vpop.f32.mrb[0].mxu0
  %v516 = vadd.f32 %v415, %v515
  %v517 = vpop.f32.mrb[0].mxu0
  %v518 = vpop.f32.mrb[0].mxu0
  %v519 = vadd.f32 %v415, %v518
  %v520 = vpop.f32.mrb[0].mxu0
  %521 = vmatprep.mubr.bf16.mxu0 0
  %522 = vmatmul.mubr.bf16.gmra.mrb[0].mxu0 %v381
  %v523 = vpop.f32.mrb[0].mxu0
  %v524 = vadd.f32 %v415, %v523
  %v525 = vpop.f32.mrb[0].mxu0
  %v526 = vpop.f32.mrb[0].mxu0
  %v527 = vadd.f32 %v415, %v526
  %v528 = vpop.f32.mrb[0].mxu0
  %529 = vmatprep.mubr.bf16.mxu0 0
  %530 = vmatmul.mubr.bf16.gmra.mrb[0].mxu0 %v382
  %v531 = vpop.f32.mrb[0].mxu0
  %v532 = vadd.f32 %v415, %v531
  %v533 = vpop.f32.mrb[0].mxu0
  %v534 = vpop.f32.mrb[0].mxu0
  %v535 = vadd.f32 %v415, %v534
  %v536 = vpop.f32.mrb[0].mxu0
  %537 = vmatprep.mubr.bf16.mxu0 0
  %538 = vmatmul.mubr.bf16.gmra.mrb[0].mxu0 %v383
  %v539 = vpop.f32.mrb[0].mxu0
  %v540 = vadd.f32 %v415, %v539
  %v541 = vpop.f32.mrb[0].mxu0
  %v542 = vpop.f32.mrb[0].mxu0
  %v543 = vadd.f32 %v415, %v542
  %v544 = vpop.f32.mrb[0].mxu0
  %545 = vmatprep.mubr.bf16.mxu0 0
  %546 = vmatmul.mubr.bf16.gmra.mrb[0].mxu0 %v384
  %v547 = vpop.f32.mrb[0].mxu0
  %v548 = vadd.f32 %v415, %v547
  %v549 = vpop.f32.mrb[0].mxu0
  %v550 = vpop.f32.mrb[0].mxu0
  %v551 = vadd.f32 %v415, %v550
  %v552 = vpop.f32.mrb[0].mxu0
  %553 = vmatprep.mubr.bf16.mxu0 0
  %554 = vmatmul.mubr.bf16.gmra.mrb[0].mxu0 %v385
  %v555 = vpop.f32.mrb[0].mxu0
  %v556 = vadd.f32 %v415, %v555
  %v557 = vpop.f32.mrb[0].mxu0
  %v558 = vpop.f32.mrb[0].mxu0
  %v559 = vadd.f32 %v415, %v558
  %v560 = vpop.f32.mrb[0].mxu0
  %561 = vmatprep.mubr.bf16.mxu0 0
  %562 = vmatmul.mubr.bf16.gmra.mrb[0].mxu0 %v386
  %v563 = vpop.f32.mrb[0].mxu0
  %v564 = vadd.f32 %v415, %v563
  %v565 = vpop.f32.mrb[0].mxu0
  %v566 = vpop.f32.mrb[0].mxu0
  %v567 = vadd.f32 %v415, %v566
  %v568 = vpop.f32.mrb[0].mxu0
  %569 = vmatprep.mubr.bf16.mxu0 0
  %570 = vmatmul.mubr.bf16.gmra.mrb[0].mxu0 %v387
  %v571 = vpop.f32.mrb[0].mxu0
  %v572 = vadd.f32 %v415, %v571
  %v573 = vpop.f32.mrb[0].mxu0
  %v574 = vpop.f32.mrb[0].mxu0
  %v575 = vadd.f32 %v415, %v574
  %v576 = vpop.f32.mrb[0].mxu0
  %577 = vmatprep.mubr.bf16.mxu0 0
  %578 = vmatmul.mubr.bf16.gmra.mrb[0].mxu0 %v388
  %v579 = vpop.f32.mrb[0].mxu0
  %v580 = vadd.f32 %v415, %v579
  %v581 = vpop.f32.mrb[0].mxu0
  %v582 = vpop.f32.mrb[0].mxu0
  %v583 = vadd.f32 %v415, %v582
  %v584 = vpop.f32.mrb[0].mxu0
  %585 = vmatprep.mubr.bf16.mxu0 0
  %586 = vmatmul.mubr.bf16.gmra.mrb[0].mxu0 %v389
  %v587 = vpop.f32.mrb[0].mxu0
  %v588 = vadd.f32 %v415, %v587
  %v589 = vpop.f32.mrb[0].mxu0
  %v590 = vpop.f32.mrb[0].mxu0
  %v591 = vadd.f32 %v415, %v590
  %v592 = vpop.f32.mrb[0].mxu0
  %593 = vmatprep.mubr.bf16.mxu0 0
  %594 = vmatmul.mubr.bf16.gmra.mrb[0].mxu0 %v390
  %v595 = vpop.f32.mrb[0].mxu0
  %v596 = vadd.f32 %v415, %v595
  %v597 = vpop.f32.mrb[0].mxu0
  %v598 = vpop.f32.mrb[0].mxu0
  %v599 = vadd.f32 %v415, %v598
  %v600 = vpop.f32.mrb[0].mxu0
  %601 = vmatprep.mubr.bf16.mxu0 0
  %602 = vmatmul.mubr.bf16.gmra.mrb[0].mxu0 %v391
  %v603 = vpop.f32.mrb[0].mxu0
  %v604 = vadd.f32 %v415, %v603
  %v605 = vpop.f32.mrb[0].mxu0
  %v606 = vpop.f32.mrb[0].mxu0
  %v607 = vadd.f32 %v415, %v606
  %v608 = vpop.f32.mrb[0].mxu0
  %609 = vmatprep.mubr.bf16.mxu0 0
  %610 = vmatmul.mubr.bf16.gmra.mrb[0].mxu0 %v392
  %v611 = vpop.f32.mrb[0].mxu0
  %v612 = vadd.f32 %v415, %v611
  %v613 = vpop.f32.mrb[0].mxu0
  %v614 = vpop.f32.mrb[0].mxu0
  %v615 = vadd.f32 %v415, %v614
  %v616 = vpop.f32.mrb[0].mxu0
  %617 = vmatprep.mubr.bf16.mxu0 0
  %618 = vmatmul.mubr.bf16.gmra.mrb[0].mxu0 %v393
  %v619 = vpop.f32.mrb[0].mxu0
  %v620 = vadd.f32 %v415, %v619
  %v621 = vpop.f32.mrb[0].mxu0
  %v622 = vpop.f32.mrb[0].mxu0
  %v623 = vadd.f32 %v415, %v622
  %v624 = vpop.f32.mrb[0].mxu0
  %625 = vdwg.mxu0
  %v626 = vmul.f32 %v500, 0.01
  %v627 = vmul.f32 %v503, 0.01
  %v628 = vmul.f32 %v508, 0.01
  %v629 = vmul.f32 %v511, 0.01
  %v630 = vmul.f32 %v516, 0.01
  %v631 = vmul.f32 %v519, 0.01
  %v632 = vmul.f32 %v524, 0.01
  %v633 = vmul.f32 %v527, 0.01
  %v634 = vmul.f32 %v532, 0.01
  %v635 = vmul.f32 %v535, 0.01
  %v636 = vmul.f32 %v540, 0.01
  %v637 = vmul.f32 %v543, 0.01
  %v638 = vmul.f32 %v548, 0.01
  %v639 = vmul.f32 %v551, 0.01
  %v640 = vmul.f32 %v556, 0.01
  %v641 = vmul.f32 %v559, 0.01
  %v642 = vmul.f32 %v564, 0.01
  %v643 = vmul.f32 %v567, 0.01
  %v644 = vmul.f32 %v572, 0.01
  %v645 = vmul.f32 %v575, 0.01
  %v646 = vmul.f32 %v580, 0.01
  %v647 = vmul.f32 %v583, 0.01
  %v648 = vmul.f32 %v588, 0.01
  %v649 = vmul.f32 %v591, 0.01
  %v650 = vmul.f32 %v596, 0.01
  %v651 = vmul.f32 %v599, 0.01
  %v652 = vmul.f32 %v604, 0.01
  %v653 = vmul.f32 %v607, 0.01
  %v654 = vmul.f32 %v612, 0.01
  %v655 = vmul.f32 %v615, 0.01
  %v656 = vmul.f32 %v620, 0.01
  %v657 = vmul.f32 %v623, 0.01
  %v658 = vmax.f32 %v500, %v626
  %v659 = vmax.f32 %v503, %v627
  %v660 = vmax.f32 %v508, %v628
  %v661 = vmax.f32 %v511, %v629
  %v662 = vmax.f32 %v516, %v630
  %v663 = vmax.f32 %v519, %v631
  %v664 = vmax.f32 %v524, %v632
  %v665 = vmax.f32 %v527, %v633
  %v666 = vmax.f32 %v532, %v634
  %v667 = vmax.f32 %v535, %v635
  %v668 = vmax.f32 %v540, %v636
  %v669 = vmax.f32 %v543, %v637
  %v670 = vmax.f32 %v548, %v638
  %v671 = vmax.f32 %v551, %v639
  %v672 = vmax.f32 %v556, %v640
  %v673 = vmax.f32 %v559, %v641
  %v674 = vmax.f32 %v564, %v642
  %v675 = vmax.f32 %v567, %v643
  %v676 = vmax.f32 %v572, %v644
  %v677 = vmax.f32 %v575, %v645
  %v678 = vmax.f32 %v580, %v646
  %v679 = vmax.f32 %v583, %v647
  %v680 = vmax.f32 %v588, %v648
  %v681 = vmax.f32 %v591, %v649
  %v682 = vmax.f32 %v596, %v650
  %v683 = vmax.f32 %v599, %v651
  %v684 = vmax.f32 %v604, %v652
  %v685 = vmax.f32 %v607, %v653
  %v686 = vmax.f32 %v612, %v654
  %v687 = vmax.f32 %v615, %v655
  %v688 = vmax.f32 %v620, %v656
  %v689 = vmax.f32 %v623, %v657
  %v690 = vpack.c.bf16 %v659, %v658
  %v691 = vpack.c.bf16 %v661, %v660
  %v692 = vpack.c.bf16 %v663, %v662
  %v693 = vpack.c.bf16 %v665, %v664
  %v694 = vpack.c.bf16 %v667, %v666
  %v695 = vpack.c.bf16 %v669, %v668
  %v696 = vpack.c.bf16 %v671, %v670
  %v697 = vpack.c.bf16 %v673, %v672
  %v698 = vpack.c.bf16 %v675, %v674
  %v699 = vpack.c.bf16 %v677, %v676
  %v700 = vpack.c.bf16 %v679, %v678
  %v701 = vpack.c.bf16 %v681, %v680
  %v702 = vpack.c.bf16 %v683, %v682
  %v703 = vpack.c.bf16 %v685, %v684
  %v704 = vpack.c.bf16 %v687, %v686
  %v705 = vpack.c.bf16 %v689, %v688
  %v706 = vld [vmem:[%s5] sm:$0xf]
  %v707 = vld [vmem:[%s5 + $0x4] sm:$0xf]
  %v708 = vld [vmem:[%s5 + $0x8] sm:$0xf]
  %v709 = vld [vmem:[%s5 + $0xc] sm:$0xf]
  %v710 = vld [vmem:[%s5 + $0x10] sm:$0xf]
  %v711 = vld [vmem:[%s5 + $0x14] sm:$0xf]
  %v712 = vld [vmem:[%s5 + $0x18] sm:$0xf]
  %v713 = vld [vmem:[%s5 + $0x1c] sm:$0xf]
  %v714 = vld [vmem:[%s5 + $0x20] sm:$0xf]
  %v715 = vld [vmem:[%s5 + $0x24] sm:$0xf]
  %v716 = vld [vmem:[%s5 + $0x28] sm:$0xf]
  %v717 = vld [vmem:[%s5 + $0x2c] sm:$0xf]
  %v718 = vld [vmem:[%s5 + $0x30] sm:$0xf]
  %v719 = vld [vmem:[%s5 + $0x34] sm:$0xf]
  %v720 = vld [vmem:[%s5 + $0x38] sm:$0xf]
  %v721 = vld [vmem:[%s5 + $0x3c] sm:$0xf]
  %v722 = vld [vmem:[%s6] sm:$0x1]
  %v724 = vlaneseq
  %v725 = vshrl.u32 %v724, 7
  %v726 = vsub.s32 0, %v725
  %v727 = vrot.slane %v722, %v726
  %v745 = vunpack.c.l.b16 %v706
  %v746 = vunpack.c.l.b16 %v707
  %v747 = vunpack.c.l.b16 %v708
  %v748 = vunpack.c.l.b16 %v709
  %v749 = vunpack.c.l.b16 %v710
  %v750 = vunpack.c.l.b16 %v711
  %v751 = vunpack.c.l.b16 %v712
  %v752 = vunpack.c.l.b16 %v713
  %v753 = vunpack.c.l.b16 %v714
  %v754 = vunpack.c.l.b16 %v715
  %v755 = vunpack.c.l.b16 %v716
  %v756 = vunpack.c.l.b16 %v717
  %v757 = vunpack.c.l.b16 %v718
  %v758 = vunpack.c.l.b16 %v719
  %v759 = vunpack.c.l.b16 %v720
  %v760 = vunpack.c.l.b16 %v721
  %v761 = vpack.c.b16 %v746, %v745
  %v762 = vpack.c.b16 %v748, %v747
  %v763 = vpack.c.b16 %v750, %v749
  %v764 = vpack.c.b16 %v752, %v751
  %v765 = vpack.c.b16 %v754, %v753
  %v766 = vpack.c.b16 %v756, %v755
  %v767 = vpack.c.b16 %v758, %v757
  %v768 = vpack.c.b16 %v760, %v759
  %777 = vmatprep.subr.bf16.mxu0 0
  %778 = vmatpush1.bf16.msra.mxu0 %v761
  %779 = vmatprep.subr.bf16.mxu0 0
  %780 = vmatpush1.bf16.msra.mxu0 %v762
  %781 = vmatprep.subr.bf16.mxu0 0
  %782 = vmatpush1.bf16.msra.mxu0 %v763
  %783 = vmatprep.subr.bf16.mxu0 0
  %784 = vmatpush1.bf16.msra.mxu0 %v764
  %785 = vmatprep.subr.bf16.mxu0 0
  %786 = vmatpush1.bf16.msra.mxu0 %v765
  %787 = vmatprep.subr.bf16.mxu0 0
  %788 = vmatpush1.bf16.msra.mxu0 %v766
  %789 = vmatprep.subr.bf16.mxu0 0
  %790 = vmatpush1.bf16.msra.mxu0 %v767
  %791 = vmatprep.subr.bf16.mxu0 0
  %792 = vmatpush1.bf16.msra.mxu0 %v768
  %793 = vmatprep.subr.bf16.mxu0 0
  %794 = vmatpush1.bf16.msra.mxu0 0
  %795 = vmatprep.subr.bf16.mxu0 0
  %796 = vmatpush1.bf16.msra.mxu0 0
  %797 = vmatprep.subr.bf16.mxu0 0
  %798 = vmatpush1.bf16.msra.mxu0 0
  %799 = vmatprep.subr.bf16.mxu0 0
  %800 = vmatpush1.bf16.msra.mxu0 0
  %801 = vmatprep.subr.bf16.mxu0 0
  %802 = vmatpush1.bf16.msra.mxu0 0
  %803 = vmatprep.subr.bf16.mxu0 0
  %804 = vmatpush1.bf16.msra.mxu0 0
  %805 = vmatprep.subr.bf16.mxu0 0
  %806 = vmatpush1.bf16.msra.mxu0 0
  %807 = vmatprep.subr.bf16.mxu0 0
  %808 = vmatpush1.bf16.msra.mxu0 0
  %809 = vmatprep.mubr.bf16.mxu0 0
  %810 = vmatmul.mubr.bf16.gmra.mrb[0].mxu0 %v690
  %v811 = vpop.f32.mrb[0].mxu0
  %v812 = vadd.f32 %v727, %v811
  %v813 = vpop.f32.mrb[0].mxu0
  %v814 = vpop.f32.mrb[0].mxu0
  %v815 = vadd.f32 %v727, %v814
  %v816 = vpop.f32.mrb[0].mxu0
  %817 = vmatprep.mubr.bf16.mxu0 0
  %818 = vmatmul.mubr.bf16.gmra.mrb[0].mxu0 %v691
  %v819 = vpop.f32.mrb[0].mxu0
  %v820 = vadd.f32 %v727, %v819
  %v821 = vpop.f32.mrb[0].mxu0
  %v822 = vpop.f32.mrb[0].mxu0
  %v823 = vadd.f32 %v727, %v822
  %v824 = vpop.f32.mrb[0].mxu0
  %825 = vmatprep.mubr.bf16.mxu0 0
  %826 = vmatmul.mubr.bf16.gmra.mrb[0].mxu0 %v692
  %v827 = vpop.f32.mrb[0].mxu0
  %v828 = vadd.f32 %v727, %v827
  %v829 = vpop.f32.mrb[0].mxu0
  %v830 = vpop.f32.mrb[0].mxu0
  %v831 = vadd.f32 %v727, %v830
  %v832 = vpop.f32.mrb[0].mxu0
  %833 = vmatprep.mubr.bf16.mxu0 0
  %834 = vmatmul.mubr.bf16.gmra.mrb[0].mxu0 %v693
  %v835 = vpop.f32.mrb[0].mxu0
  %v836 = vadd.f32 %v727, %v835
  %v837 = vpop.f32.mrb[0].mxu0
  %v838 = vpop.f32.mrb[0].mxu0
  %v839 = vadd.f32 %v727, %v838
  %v840 = vpop.f32.mrb[0].mxu0
  %841 = vmatprep.mubr.bf16.mxu0 0
  %842 = vmatmul.mubr.bf16.gmra.mrb[0].mxu0 %v694
  %v843 = vpop.f32.mrb[0].mxu0
  %v844 = vadd.f32 %v727, %v843
  %v845 = vpop.f32.mrb[0].mxu0
  %v846 = vpop.f32.mrb[0].mxu0
  %v847 = vadd.f32 %v727, %v846
  %v848 = vpop.f32.mrb[0].mxu0
  %849 = vmatprep.mubr.bf16.mxu0 0
  %850 = vmatmul.mubr.bf16.gmra.mrb[0].mxu0 %v695
  %v851 = vpop.f32.mrb[0].mxu0
  %v852 = vadd.f32 %v727, %v851
  %v853 = vpop.f32.mrb[0].mxu0
  %v854 = vpop.f32.mrb[0].mxu0
  %v855 = vadd.f32 %v727, %v854
  %v856 = vpop.f32.mrb[0].mxu0
  %857 = vmatprep.mubr.bf16.mxu0 0
  %858 = vmatmul.mubr.bf16.gmra.mrb[0].mxu0 %v696
  %v859 = vpop.f32.mrb[0].mxu0
  %v860 = vadd.f32 %v727, %v859
  %v861 = vpop.f32.mrb[0].mxu0
  %v862 = vpop.f32.mrb[0].mxu0
  %v863 = vadd.f32 %v727, %v862
  %v864 = vpop.f32.mrb[0].mxu0
  %865 = vmatprep.mubr.bf16.mxu0 0
  %866 = vmatmul.mubr.bf16.gmra.mrb[0].mxu0 %v697
  %v867 = vpop.f32.mrb[0].mxu0
  %v868 = vadd.f32 %v727, %v867
  %v869 = vpop.f32.mrb[0].mxu0
  %v870 = vpop.f32.mrb[0].mxu0
  %v871 = vadd.f32 %v727, %v870
  %v872 = vpop.f32.mrb[0].mxu0
  %873 = vmatprep.mubr.bf16.mxu0 0
  %874 = vmatmul.mubr.bf16.gmra.mrb[0].mxu0 %v698
  %v875 = vpop.f32.mrb[0].mxu0
  %v876 = vadd.f32 %v727, %v875
  %v877 = vpop.f32.mrb[0].mxu0
  %v878 = vpop.f32.mrb[0].mxu0
  %v879 = vadd.f32 %v727, %v878
  %v880 = vpop.f32.mrb[0].mxu0
  %881 = vmatprep.mubr.bf16.mxu0 0
  %882 = vmatmul.mubr.bf16.gmra.mrb[0].mxu0 %v699
  %v883 = vpop.f32.mrb[0].mxu0
  %v884 = vadd.f32 %v727, %v883
  %v885 = vpop.f32.mrb[0].mxu0
  %v886 = vpop.f32.mrb[0].mxu0
  %v887 = vadd.f32 %v727, %v886
  %v888 = vpop.f32.mrb[0].mxu0
  %889 = vmatprep.mubr.bf16.mxu0 0
  %890 = vmatmul.mubr.bf16.gmra.mrb[0].mxu0 %v700
  %v891 = vpop.f32.mrb[0].mxu0
  %v892 = vadd.f32 %v727, %v891
  %v893 = vpop.f32.mrb[0].mxu0
  %v894 = vpop.f32.mrb[0].mxu0
  %v895 = vadd.f32 %v727, %v894
  %v896 = vpop.f32.mrb[0].mxu0
  %897 = vmatprep.mubr.bf16.mxu0 0
  %898 = vmatmul.mubr.bf16.gmra.mrb[0].mxu0 %v701
  %v899 = vpop.f32.mrb[0].mxu0
  %v900 = vadd.f32 %v727, %v899
  %v901 = vpop.f32.mrb[0].mxu0
  %v902 = vpop.f32.mrb[0].mxu0
  %v903 = vadd.f32 %v727, %v902
  %v904 = vpop.f32.mrb[0].mxu0
  %905 = vmatprep.mubr.bf16.mxu0 0
  %906 = vmatmul.mubr.bf16.gmra.mrb[0].mxu0 %v702
  %v907 = vpop.f32.mrb[0].mxu0
  %v908 = vadd.f32 %v727, %v907
  %v909 = vpop.f32.mrb[0].mxu0
  %v910 = vpop.f32.mrb[0].mxu0
  %v911 = vadd.f32 %v727, %v910
  %v912 = vpop.f32.mrb[0].mxu0
  %913 = vmatprep.mubr.bf16.mxu0 0
  %914 = vmatmul.mubr.bf16.gmra.mrb[0].mxu0 %v703
  %v915 = vpop.f32.mrb[0].mxu0
  %v916 = vadd.f32 %v727, %v915
  %v917 = vpop.f32.mrb[0].mxu0
  %v918 = vpop.f32.mrb[0].mxu0
  %v919 = vadd.f32 %v727, %v918
  %v920 = vpop.f32.mrb[0].mxu0
  %921 = vmatprep.mubr.bf16.mxu0 0
  %922 = vmatmul.mubr.bf16.gmra.mrb[0].mxu0 %v704
  %v923 = vpop.f32.mrb[0].mxu0
  %v924 = vadd.f32 %v727, %v923
  %v925 = vpop.f32.mrb[0].mxu0
  %v926 = vpop.f32.mrb[0].mxu0
  %v927 = vadd.f32 %v727, %v926
  %v928 = vpop.f32.mrb[0].mxu0
  %929 = vmatprep.mubr.bf16.mxu0 0
  %930 = vmatmul.mubr.bf16.gmra.mrb[0].mxu0 %v705
  %v931 = vpop.f32.mrb[0].mxu0
  %v932 = vadd.f32 %v727, %v931
  %v933 = vpop.f32.mrb[0].mxu0
  %v934 = vpop.f32.mrb[0].mxu0
  %v935 = vadd.f32 %v727, %v934
  %v936 = vpop.f32.mrb[0].mxu0
  %937 = vdwg.mxu0
  %v938 = vmul.f32 %v812, 0.01
  %v939 = vmul.f32 %v815, 0.01
  %v940 = vmul.f32 %v820, 0.01
  %v941 = vmul.f32 %v823, 0.01
  %v942 = vmul.f32 %v828, 0.01
  %v943 = vmul.f32 %v831, 0.01
  %v944 = vmul.f32 %v836, 0.01
  %v945 = vmul.f32 %v839, 0.01
  %v946 = vmul.f32 %v844, 0.01
  %v947 = vmul.f32 %v847, 0.01
  %v948 = vmul.f32 %v852, 0.01
  %v949 = vmul.f32 %v855, 0.01
  %v950 = vmul.f32 %v860, 0.01
  %v951 = vmul.f32 %v863, 0.01
  %v952 = vmul.f32 %v868, 0.01
  %v953 = vmul.f32 %v871, 0.01
  %v954 = vmul.f32 %v876, 0.01
  %v955 = vmul.f32 %v879, 0.01
  %v956 = vmul.f32 %v884, 0.01
  %v957 = vmul.f32 %v887, 0.01
  %v958 = vmul.f32 %v892, 0.01
  %v959 = vmul.f32 %v895, 0.01
  %v960 = vmul.f32 %v900, 0.01
  %v961 = vmul.f32 %v903, 0.01
  %v962 = vmul.f32 %v908, 0.01
  %v963 = vmul.f32 %v911, 0.01
  %v964 = vmul.f32 %v916, 0.01
  %v965 = vmul.f32 %v919, 0.01
  %v966 = vmul.f32 %v924, 0.01
  %v967 = vmul.f32 %v927, 0.01
  %v968 = vmul.f32 %v932, 0.01
  %v969 = vmul.f32 %v935, 0.01
  %v970 = vmax.f32 %v812, %v938
  %v971 = vmax.f32 %v815, %v939
  %v972 = vmax.f32 %v820, %v940
  %v973 = vmax.f32 %v823, %v941
  %v974 = vmax.f32 %v828, %v942
  %v975 = vmax.f32 %v831, %v943
  %v976 = vmax.f32 %v836, %v944
  %v977 = vmax.f32 %v839, %v945
  %v978 = vmax.f32 %v844, %v946
  %v979 = vmax.f32 %v847, %v947
  %v980 = vmax.f32 %v852, %v948
  %v981 = vmax.f32 %v855, %v949
  %v982 = vmax.f32 %v860, %v950
  %v983 = vmax.f32 %v863, %v951
  %v984 = vmax.f32 %v868, %v952
  %v985 = vmax.f32 %v871, %v953
  %v986 = vmax.f32 %v876, %v954
  %v987 = vmax.f32 %v879, %v955
  %v988 = vmax.f32 %v884, %v956
  %v989 = vmax.f32 %v887, %v957
  %v990 = vmax.f32 %v892, %v958
  %v991 = vmax.f32 %v895, %v959
  %v992 = vmax.f32 %v900, %v960
  %v993 = vmax.f32 %v903, %v961
  %v994 = vmax.f32 %v908, %v962
  %v995 = vmax.f32 %v911, %v963
  %v996 = vmax.f32 %v916, %v964
  %v997 = vmax.f32 %v919, %v965
  %v998 = vmax.f32 %v924, %v966
  %v999 = vmax.f32 %v927, %v967
  %v1000 = vmax.f32 %v932, %v968
  %v1001 = vmax.f32 %v935, %v969
  %v1002 = vpack.c.bf16 %v971, %v970
  %v1003 = vpack.c.bf16 %v973, %v972
  %v1004 = vpack.c.bf16 %v975, %v974
  %v1005 = vpack.c.bf16 %v977, %v976
  %v1006 = vpack.c.bf16 %v979, %v978
  %v1007 = vpack.c.bf16 %v981, %v980
  %v1008 = vpack.c.bf16 %v983, %v982
  %v1009 = vpack.c.bf16 %v985, %v984
  %v1010 = vpack.c.bf16 %v987, %v986
  %v1011 = vpack.c.bf16 %v989, %v988
  %v1012 = vpack.c.bf16 %v991, %v990
  %v1013 = vpack.c.bf16 %v993, %v992
  %v1014 = vpack.c.bf16 %v995, %v994
  %v1015 = vpack.c.bf16 %v997, %v996
  %v1016 = vpack.c.bf16 %v999, %v998
  %v1017 = vpack.c.bf16 %v1001, %v1000
  %v1018 = vld [vmem:[%s7] sm:$0xf]
  %v1019 = vld [vmem:[%s7 + $0x4] sm:$0xf]
  %v1020 = vld [vmem:[%s7 + $0x8] sm:$0xf]
  %v1021 = vld [vmem:[%s7 + $0xc] sm:$0xf]
  %v1022 = vld [vmem:[%s7 + $0x10] sm:$0xf]
  %v1023 = vld [vmem:[%s7 + $0x14] sm:$0xf]
  %v1024 = vld [vmem:[%s7 + $0x18] sm:$0xf]
  %v1025 = vld [vmem:[%s7 + $0x1c] sm:$0xf]
  %v1026 = vld [vmem:[%s7 + $0x20] sm:$0xf]
  %v1027 = vld [vmem:[%s7 + $0x24] sm:$0xf]
  %v1028 = vld [vmem:[%s7 + $0x28] sm:$0xf]
  %v1029 = vld [vmem:[%s7 + $0x2c] sm:$0xf]
  %v1030 = vld [vmem:[%s7 + $0x30] sm:$0xf]
  %v1031 = vld [vmem:[%s7 + $0x34] sm:$0xf]
  %v1032 = vld [vmem:[%s7 + $0x38] sm:$0xf]
  %v1033 = vld [vmem:[%s7 + $0x3c] sm:$0xf]
  %v1034 = vld [vmem:[%s8] sm:$0x1]
  %v1036 = vlaneseq
  %v1037 = vshrl.u32 %v1036, 7
  %v1038 = vsub.s32 0, %v1037
  %v1039 = vrot.slane %v1034, %v1038
  %v1057 = vunpack.c.l.b16 %v1018
  %v1058 = vunpack.c.l.b16 %v1019
  %v1059 = vunpack.c.l.b16 %v1020
  %v1060 = vunpack.c.l.b16 %v1021
  %v1061 = vunpack.c.l.b16 %v1022
  %v1062 = vunpack.c.l.b16 %v1023
  %v1063 = vunpack.c.l.b16 %v1024
  %v1064 = vunpack.c.l.b16 %v1025
  %v1065 = vunpack.c.l.b16 %v1026
  %v1066 = vunpack.c.l.b16 %v1027
  %v1067 = vunpack.c.l.b16 %v1028
  %v1068 = vunpack.c.l.b16 %v1029
  %v1069 = vunpack.c.l.b16 %v1030
  %v1070 = vunpack.c.l.b16 %v1031
  %v1071 = vunpack.c.l.b16 %v1032
  %v1072 = vunpack.c.l.b16 %v1033
  %v1073 = vpack.c.b16 %v1058, %v1057
  %v1074 = vpack.c.b16 %v1060, %v1059
  %v1075 = vpack.c.b16 %v1062, %v1061
  %v1076 = vpack.c.b16 %v1064, %v1063
  %v1077 = vpack.c.b16 %v1066, %v1065
  %v1078 = vpack.c.b16 %v1068, %v1067
  %v1079 = vpack.c.b16 %v1070, %v1069
  %v1080 = vpack.c.b16 %v1072, %v1071
  %1089 = vmatprep.subr.bf16.mxu0 0
  %1090 = vmatpush1.bf16.msra.mxu0 %v1073
  %1091 = vmatprep.subr.bf16.mxu0 0
  %1092 = vmatpush1.bf16.msra.mxu0 %v1074
  %1093 = vmatprep.subr.bf16.mxu0 0
  %1094 = vmatpush1.bf16.msra.mxu0 %v1075
  %1095 = vmatprep.subr.bf16.mxu0 0
  %1096 = vmatpush1.bf16.msra.mxu0 %v1076
  %1097 = vmatprep.subr.bf16.mxu0 0
  %1098 = vmatpush1.bf16.msra.mxu0 %v1077
  %1099 = vmatprep.subr.bf16.mxu0 0
  %1100 = vmatpush1.bf16.msra.mxu0 %v1078
  %1101 = vmatprep.subr.bf16.mxu0 0
  %1102 = vmatpush1.bf16.msra.mxu0 %v1079
  %1103 = vmatprep.subr.bf16.mxu0 0
  %1104 = vmatpush1.bf16.msra.mxu0 %v1080
  %1105 = vmatprep.subr.bf16.mxu0 0
  %1106 = vmatpush1.bf16.msra.mxu0 0
  %1107 = vmatprep.subr.bf16.mxu0 0
  %1108 = vmatpush1.bf16.msra.mxu0 0
  %1109 = vmatprep.subr.bf16.mxu0 0
  %1110 = vmatpush1.bf16.msra.mxu0 0
  %1111 = vmatprep.subr.bf16.mxu0 0
  %1112 = vmatpush1.bf16.msra.mxu0 0
  %1113 = vmatprep.subr.bf16.mxu0 0
  %1114 = vmatpush1.bf16.msra.mxu0 0
  %1115 = vmatprep.subr.bf16.mxu0 0
  %1116 = vmatpush1.bf16.msra.mxu0 0
  %1117 = vmatprep.subr.bf16.mxu0 0
  %1118 = vmatpush1.bf16.msra.mxu0 0
  %1119 = vmatprep.subr.bf16.mxu0 0
  %1120 = vmatpush1.bf16.msra.mxu0 0
  %1121 = vmatprep.mubr.bf16.mxu0 0
  %1122 = vmatmul.mubr.bf16.gmra.mrb[0].mxu0 %v1002
  %v1123 = vpop.f32.mrb[0].mxu0
  %v1124 = vadd.f32 %v1039, %v1123
  %v1125 = vpop.f32.mrb[0].mxu0
  %v1126 = vpop.f32.mrb[0].mxu0
  %v1127 = vadd.f32 %v1039, %v1126
  %v1128 = vpop.f32.mrb[0].mxu0
  %1129 = vmatprep.mubr.bf16.mxu0 0
  %1130 = vmatmul.mubr.bf16.gmra.mrb[0].mxu0 %v1003
  %v1131 = vpop.f32.mrb[0].mxu0
  %v1132 = vadd.f32 %v1039, %v1131
  %v1133 = vpop.f32.mrb[0].mxu0
  %v1134 = vpop.f32.mrb[0].mxu0
  %v1135 = vadd.f32 %v1039, %v1134
  %v1136 = vpop.f32.mrb[0].mxu0
  %1137 = vmatprep.mubr.bf16.mxu0 0
  %1138 = vmatmul.mubr.bf16.gmra.mrb[0].mxu0 %v1004
  %v1139 = vpop.f32.mrb[0].mxu0
  %v1140 = vadd.f32 %v1039, %v1139
  %v1141 = vpop.f32.mrb[0].mxu0
  %v1142 = vpop.f32.mrb[0].mxu0
  %v1143 = vadd.f32 %v1039, %v1142
  %v1144 = vpop.f32.mrb[0].mxu0
  %1145 = vmatprep.mubr.bf16.mxu0 0
  %1146 = vmatmul.mubr.bf16.gmra.mrb[0].mxu0 %v1005
  %v1147 = vpop.f32.mrb[0].mxu0
  %v1148 = vadd.f32 %v1039, %v1147
  %v1149 = vpop.f32.mrb[0].mxu0
  %v1150 = vpop.f32.mrb[0].mxu0
  %v1151 = vadd.f32 %v1039, %v1150
  %v1152 = vpop.f32.mrb[0].mxu0
  %1153 = vmatprep.mubr.bf16.mxu0 0
  %1154 = vmatmul.mubr.bf16.gmra.mrb[0].mxu0 %v1006
  %v1155 = vpop.f32.mrb[0].mxu0
  %v1156 = vadd.f32 %v1039, %v1155
  %v1157 = vpop.f32.mrb[0].mxu0
  %v1158 = vpop.f32.mrb[0].mxu0
  %v1159 = vadd.f32 %v1039, %v1158
  %v1160 = vpop.f32.mrb[0].mxu0
  %1161 = vmatprep.mubr.bf16.mxu0 0
  %1162 = vmatmul.mubr.bf16.gmra.mrb[0].mxu0 %v1007
  %v1163 = vpop.f32.mrb[0].mxu0
  %v1164 = vadd.f32 %v1039, %v1163
  %v1165 = vpop.f32.mrb[0].mxu0
  %v1166 = vpop.f32.mrb[0].mxu0
  %v1167 = vadd.f32 %v1039, %v1166
  %v1168 = vpop.f32.mrb[0].mxu0
  %1169 = vmatprep.mubr.bf16.mxu0 0
  %1170 = vmatmul.mubr.bf16.gmra.mrb[0].mxu0 %v1008
  %v1171 = vpop.f32.mrb[0].mxu0
  %v1172 = vadd.f32 %v1039, %v1171
  %v1173 = vpop.f32.mrb[0].mxu0
  %v1174 = vpop.f32.mrb[0].mxu0
  %v1175 = vadd.f32 %v1039, %v1174
  %v1176 = vpop.f32.mrb[0].mxu0
  %1177 = vmatprep.mubr.bf16.mxu0 0
  %1178 = vmatmul.mubr.bf16.gmra.mrb[0].mxu0 %v1009
  %v1179 = vpop.f32.mrb[0].mxu0
  %v1180 = vadd.f32 %v1039, %v1179
  %v1181 = vpop.f32.mrb[0].mxu0
  %v1182 = vpop.f32.mrb[0].mxu0
  %v1183 = vadd.f32 %v1039, %v1182
  %v1184 = vpop.f32.mrb[0].mxu0
  %1185 = vmatprep.mubr.bf16.mxu0 0
  %1186 = vmatmul.mubr.bf16.gmra.mrb[0].mxu0 %v1010
  %v1187 = vpop.f32.mrb[0].mxu0
  %v1188 = vadd.f32 %v1039, %v1187
  %v1189 = vpop.f32.mrb[0].mxu0
  %v1190 = vpop.f32.mrb[0].mxu0
  %v1191 = vadd.f32 %v1039, %v1190
  %v1192 = vpop.f32.mrb[0].mxu0
  %1193 = vmatprep.mubr.bf16.mxu0 0
  %1194 = vmatmul.mubr.bf16.gmra.mrb[0].mxu0 %v1011
  %v1195 = vpop.f32.mrb[0].mxu0
  %v1196 = vadd.f32 %v1039, %v1195
  %v1197 = vpop.f32.mrb[0].mxu0
  %v1198 = vpop.f32.mrb[0].mxu0
  %v1199 = vadd.f32 %v1039, %v1198
  %v1200 = vpop.f32.mrb[0].mxu0
  %1201 = vmatprep.mubr.bf16.mxu0 0
  %1202 = vmatmul.mubr.bf16.gmra.mrb[0].mxu0 %v1012
  %v1203 = vpop.f32.mrb[0].mxu0
  %v1204 = vadd.f32 %v1039, %v1203
  %v1205 = vpop.f32.mrb[0].mxu0
  %v1206 = vpop.f32.mrb[0].mxu0
  %v1207 = vadd.f32 %v1039, %v1206
  %v1208 = vpop.f32.mrb[0].mxu0
  %1209 = vmatprep.mubr.bf16.mxu0 0
  %1210 = vmatmul.mubr.bf16.gmra.mrb[0].mxu0 %v1013
  %v1211 = vpop.f32.mrb[0].mxu0
  %v1212 = vadd.f32 %v1039, %v1211
  %v1213 = vpop.f32.mrb[0].mxu0
  %v1214 = vpop.f32.mrb[0].mxu0
  %v1215 = vadd.f32 %v1039, %v1214
  %v1216 = vpop.f32.mrb[0].mxu0
  %1217 = vmatprep.mubr.bf16.mxu0 0
  %1218 = vmatmul.mubr.bf16.gmra.mrb[0].mxu0 %v1014
  %v1219 = vpop.f32.mrb[0].mxu0
  %v1220 = vadd.f32 %v1039, %v1219
  %v1221 = vpop.f32.mrb[0].mxu0
  %v1222 = vpop.f32.mrb[0].mxu0
  %v1223 = vadd.f32 %v1039, %v1222
  %v1224 = vpop.f32.mrb[0].mxu0
  %1225 = vmatprep.mubr.bf16.mxu0 0
  %1226 = vmatmul.mubr.bf16.gmra.mrb[0].mxu0 %v1015
  %v1227 = vpop.f32.mrb[0].mxu0
  %v1228 = vadd.f32 %v1039, %v1227
  %v1229 = vpop.f32.mrb[0].mxu0
  %v1230 = vpop.f32.mrb[0].mxu0
  %v1231 = vadd.f32 %v1039, %v1230
  %v1232 = vpop.f32.mrb[0].mxu0
  %1233 = vmatprep.mubr.bf16.mxu0 0
  %1234 = vmatmul.mubr.bf16.gmra.mrb[0].mxu0 %v1016
  %v1235 = vpop.f32.mrb[0].mxu0
  %v1236 = vadd.f32 %v1039, %v1235
  %v1237 = vpop.f32.mrb[0].mxu0
  %v1238 = vpop.f32.mrb[0].mxu0
  %v1239 = vadd.f32 %v1039, %v1238
  %v1240 = vpop.f32.mrb[0].mxu0
  %1241 = vmatprep.mubr.bf16.mxu0 0
  %1242 = vmatmul.mubr.bf16.gmra.mrb[0].mxu0 %v1017
  %v1243 = vpop.f32.mrb[0].mxu0
  %v1244 = vadd.f32 %v1039, %v1243
  %v1245 = vpop.f32.mrb[0].mxu0
  %v1246 = vpop.f32.mrb[0].mxu0
  %v1247 = vadd.f32 %v1039, %v1246
  %v1248 = vpop.f32.mrb[0].mxu0
  %1249 = vdwg.mxu0
  %v1250 = vpack.c.bf16 %v1127, %v1124
  %v1251 = vpack.c.bf16 %v1135, %v1132
  %v1252 = vpack.c.bf16 %v1143, %v1140
  %v1253 = vpack.c.bf16 %v1151, %v1148
  %v1254 = vpack.c.bf16 %v1159, %v1156
  %v1255 = vpack.c.bf16 %v1167, %v1164
  %v1256 = vpack.c.bf16 %v1175, %v1172
  %v1257 = vpack.c.bf16 %v1183, %v1180
  %v1258 = vpack.c.bf16 %v1191, %v1188
  %v1259 = vpack.c.bf16 %v1199, %v1196
  %v1260 = vpack.c.bf16 %v1207, %v1204
  %v1261 = vpack.c.bf16 %v1215, %v1212
  %v1262 = vpack.c.bf16 %v1223, %v1220
  %v1263 = vpack.c.bf16 %v1231, %v1228
  %v1264 = vpack.c.bf16 %v1239, %v1236
  %v1265 = vpack.c.bf16 %v1247, %v1244
  %v1282 = vunpack.c.l.b16 %v1250
  %v1283 = vunpack.c.h.b16 %v1250
  %v1284 = vunpack.c.l.b16 %v1251
  %v1285 = vunpack.c.h.b16 %v1251
  %v1286 = vunpack.c.l.b16 %v1252
  %v1287 = vunpack.c.h.b16 %v1252
  %v1288 = vunpack.c.l.b16 %v1253
  %v1289 = vunpack.c.h.b16 %v1253
  %v1290 = vunpack.c.l.b16 %v1254
  %v1291 = vunpack.c.h.b16 %v1254
  %v1292 = vunpack.c.l.b16 %v1255
  %v1293 = vunpack.c.h.b16 %v1255
  %v1294 = vunpack.c.l.b16 %v1256
  %v1295 = vunpack.c.h.b16 %v1256
  %v1296 = vunpack.c.l.b16 %v1257
  %v1297 = vunpack.c.h.b16 %v1257
  %v1298 = vunpack.c.l.b16 %v1258
  %v1299 = vunpack.c.h.b16 %v1258
  %v1300 = vunpack.c.l.b16 %v1259
  %v1301 = vunpack.c.h.b16 %v1259
  %v1302 = vunpack.c.l.b16 %v1260
  %v1303 = vunpack.c.h.b16 %v1260
  %v1304 = vunpack.c.l.b16 %v1261
  %v1305 = vunpack.c.h.b16 %v1261
  %v1306 = vunpack.c.l.b16 %v1262
  %v1307 = vunpack.c.h.b16 %v1262
  %v1308 = vunpack.c.l.b16 %v1263
  %v1309 = vunpack.c.h.b16 %v1263
  %v1310 = vunpack.c.l.b16 %v1264
  %v1311 = vunpack.c.h.b16 %v1264
  %v1312 = vunpack.c.l.b16 %v1265
  %v1313 = vunpack.c.h.b16 %v1265
  %v1314 = vpack.c.b16 %v1282, %v1282
  %v1315 = vpack.c.b16 %v1283, %v1283
  %v1316 = vpack.c.b16 %v1284, %v1284
  %v1317 = vpack.c.b16 %v1285, %v1285
  %v1318 = vpack.c.b16 %v1286, %v1286
  %v1319 = vpack.c.b16 %v1287, %v1287
  %v1320 = vpack.c.b16 %v1288, %v1288
  %v1321 = vpack.c.b16 %v1289, %v1289
  %v1322 = vpack.c.b16 %v1290, %v1290
  %v1323 = vpack.c.b16 %v1291, %v1291
  %v1324 = vpack.c.b16 %v1292, %v1292
  %v1325 = vpack.c.b16 %v1293, %v1293
  %v1326 = vpack.c.b16 %v1294, %v1294
  %v1327 = vpack.c.b16 %v1295, %v1295
  %v1328 = vpack.c.b16 %v1296, %v1296
  %v1329 = vpack.c.b16 %v1297, %v1297
  %v1330 = vpack.c.b16 %v1298, %v1298
  %v1331 = vpack.c.b16 %v1299, %v1299
  %v1332 = vpack.c.b16 %v1300, %v1300
  %v1333 = vpack.c.b16 %v1301, %v1301
  %v1334 = vpack.c.b16 %v1302, %v1302
  %v1335 = vpack.c.b16 %v1303, %v1303
  %v1336 = vpack.c.b16 %v1304, %v1304
  %v1337 = vpack.c.b16 %v1305, %v1305
  %v1338 = vpack.c.b16 %v1306, %v1306
  %v1339 = vpack.c.b16 %v1307, %v1307
  %v1340 = vpack.c.b16 %v1308, %v1308
  %v1341 = vpack.c.b16 %v1309, %v1309
  %v1342 = vpack.c.b16 %v1310, %v1310
  %v1343 = vpack.c.b16 %v1311, %v1311
  %v1344 = vpack.c.b16 %v1312, %v1312
  %v1345 = vpack.c.b16 %v1313, %v1313
  %1378 = vst [vmem:[%s9] sm:$0xf] %v1314
  %1379 = vst [vmem:[%s9 + $0x4] sm:$0xf] %v1315
  %1380 = vst [vmem:[%s9 + $0x8] sm:$0xf] %v1316
  %1381 = vst [vmem:[%s9 + $0xc] sm:$0xf] %v1317
  %1382 = vst [vmem:[%s9 + $0x10] sm:$0xf] %v1318
  %1383 = vst [vmem:[%s9 + $0x14] sm:$0xf] %v1319
  %1384 = vst [vmem:[%s9 + $0x18] sm:$0xf] %v1320
  %1385 = vst [vmem:[%s9 + $0x1c] sm:$0xf] %v1321
  %1386 = vst [vmem:[%s9 + $0x20] sm:$0xf] %v1322
  %1387 = vst [vmem:[%s9 + $0x24] sm:$0xf] %v1323
  %1388 = vst [vmem:[%s9 + $0x28] sm:$0xf] %v1324
  %1389 = vst [vmem:[%s9 + $0x2c] sm:$0xf] %v1325
  %1390 = vst [vmem:[%s9 + $0x30] sm:$0xf] %v1326
  %1391 = vst [vmem:[%s9 + $0x34] sm:$0xf] %v1327
  %1392 = vst [vmem:[%s9 + $0x38] sm:$0xf] %v1328
  %1393 = vst [vmem:[%s9 + $0x3c] sm:$0xf] %v1329
  %1394 = vst [vmem:[%s9 + $0x40] sm:$0xf] %v1330
  %1395 = vst [vmem:[%s9 + $0x44] sm:$0xf] %v1331
  %1396 = vst [vmem:[%s9 + $0x48] sm:$0xf] %v1332
  %1397 = vst [vmem:[%s9 + $0x4c] sm:$0xf] %v1333
  %1398 = vst [vmem:[%s9 + $0x50] sm:$0xf] %v1334
  %1399 = vst [vmem:[%s9 + $0x54] sm:$0xf] %v1335
  %1400 = vst [vmem:[%s9 + $0x58] sm:$0xf] %v1336
  %1401 = vst [vmem:[%s9 + $0x5c] sm:$0xf] %v1337
  %1402 = vst [vmem:[%s9 + $0x60] sm:$0xf] %v1338
  %1403 = vst [vmem:[%s9 + $0x64] sm:$0xf] %v1339
  %1404 = vst [vmem:[%s9 + $0x68] sm:$0xf] %v1340
  %1405 = vst [vmem:[%s9 + $0x6c] sm:$0xf] %v1341
  %1406 = vst [vmem:[%s9 + $0x70] sm:$0xf] %v1342
  %1407 = vst [vmem:[%s9 + $0x74] sm:$0xf] %v1343
  %1408 = vst [vmem:[%s9 + $0x78] sm:$0xf] %v1344
  %1409 = vst [vmem:[%s9 + $0x7c] sm:$0xf] %v1345
  // Predicated region
  $region38: #{_lambda_.1} parent=0 // pred_check
    _
  $region39: #{_lambda_.1} parent=0 // pred_check_branch
    %1411 = sbr.rel (0) target = $region41
  $region40: #{_lambda_.1} parent=0 // pred_region
    _
  $region41: #{_lambda_.1} parent=0 // pred_fallthru
    _
  // Predicated region
  $region42: #{_lambda_.1} parent=0 // pred_check
    _
  $region43: #{_lambda_.1} parent=0 // pred_check_branch
    %1413 = sbr.rel (0) target = $region45
  $region44: #{_lambda_.1} parent=0 // pred_region
    _
  $region45: #{_lambda_.1} parent=0 // pred_fallthru
    _

</llo_original>
